<compile_context>
chip_gen: v5e
topology: v5e:2x2
jax: 0.10.0
libtpu: 0.0.40
codegen_flags: <defaults>
</compile_context>

<pallas_src>
import functools

import jax
import jax.numpy as jnp
from jax import lax
from jax.experimental import pallas as pl
from jax.experimental.pallas import tpu as pltpu

LANE = 128
NCORES = 2  # v7x has 2 TensorCores/chip; on v5e/v6e this axis is just a loop.


def _cdiv(a, b):
    return -(-a // b)


def _round_up(x, m):
    return _cdiv(x, m) * m


def _gaussian_1d(win_size, sigma):
    # Matches pytorch_msssim._fspecial_gauss_1d
    coords = jnp.arange(win_size, dtype=jnp.float32) - (win_size // 2)
    g = jnp.exp(-(coords ** 2) / (2.0 * sigma ** 2))
    return g / jnp.sum(g)


def _band_block(g, k_size, n_size):
    # B[j, i] = g[j - i] for 0 <= j - i < win, else 0, so that
    # (x[:, off:off+k_size] @ B)[:, i] = sum_k g[k] * x[:, off + i + k].
    win = g.shape[0]
    j = jnp.arange(k_size)[:, None]
    i = jnp.arange(n_size)[None, :]
    d = j - i
    return jnp.where((d >= 0) & (d < win),
                     g[jnp.clip(d, 0, win - 1)], 0.0).astype(jnp.float32)


def _w_tiling(W, win):
    """Lane-direction (last dim) tiling: 128-wide output tiles."""
    Wo = W - win + 1
    Tw = _cdiv(Wo, LANE)
    Wo_pad = Tw * LANE
    tkw = LANE if W <= LANE else 2 * LANE          # K of the band block
    Wp = (Tw - 1) * LANE + tkw                     # padded input width
    return Wo, Tw, Wo_pad, tkw, Wp


def _h_tiling(H, win):
    """Sublane-direction tiling: 128-row tiles, or one small 8-aligned tile."""
    Ho = H - win + 1
    if Ho <= LANE:
        tile_h = _round_up(Ho, 8)
        Th, Ho_pad = 1, _round_up(Ho, 8)
        Hp = _round_up(H, 8)
        tkh = Hp
    else:
        tile_h = LANE
        Th = _cdiv(Ho, LANE)
        Ho_pad = Th * LANE
        tkh = 2 * LANE
        Hp = (Th - 1) * LANE + tkh
    return Ho, Th, Ho_pad, tile_h, tkh, Hp


def combined_loss(pred, target, *, alpha=0.8, data_range=1.0,
                  win_size=11, win_sigma=1.5, K=(0.01, 0.03)):
    """JAX/Pallas equivalent of CombinedLoss.forward (pred/target: (B,T,H,W))."""
    if pred.ndim == 3:
        pred = pred[:, None]
        target = target[:, None]
    assert pred.shape == target.shape and pred.ndim == 4
    B, T, H, W = pred.shape
    assert H >= win_size and W >= win_size, "SSIM needs H, W >= win_size"
    frames = B * T

    Wo, Tw, Wo_pad, tkw, Wp = _w_tiling(W, win_size)
    Ho, Th, Ho_pad, tile_h, tkh, Hp = _h_tiling(H, win_size)

    C1 = float((K[0] * data_range) ** 2)
    C2 = float((K[1] * data_range) ** 2)
    alpha = float(alpha)

    # ---- VMEM budget -> frames per grid step (Fb) and vmem_limit_bytes ----
    try:
        vmem_cap = int(pltpu.get_tpu_info().vmem_capacity_bytes)
    except Exception:
        vmem_cap = 64 * 1024 * 1024                 # v7x per-core VMEM floor
    vmem_limit = min(int(vmem_cap * 3 // 4), 112 * 1024 * 1024)
    per_frame_bytes = 4 * (2 * 2 * Hp * Wp          # pred+target, double-buffered
                           + 3 * Hp * Wp            # elementwise map temporaries
                           + Hp * Wo_pad            # row-blur scratch
                           + 5 * Ho_pad * Wo_pad    # blurred maps scratch
                           + 6 * Ho_pad * Wo_pad)   # SSIM elementwise temps
    fb_cap = max(1, (vmem_limit * 2 // 3) // per_frame_bytes)
    # TODO(synk): for very large frames (>= 1024^2) add an intra-frame row
    # tiling grid axis with an 11-row halo instead of whole-frame blocks.
    Fb = int(max(1, min(fb_cap, _cdiv(frames, NCORES), 16)))
    chunks = int(_cdiv(frames, NCORES * Fb))
    frames_pad = NCORES * chunks * Fb

    # ---- padded, lane-aligned inputs + compact band-filter blocks ---------
    pred_f = jnp.pad(pred.reshape(frames, H, W).astype(jnp.float32),
                     ((0, frames_pad - frames), (0, Hp - H), (0, Wp - W)))
    tgt_f = jnp.pad(target.reshape(frames, H, W).astype(jnp.float32),
                    ((0, frames_pad - frames), (0, Hp - H), (0, Wp - W)))

    g = _gaussian_1d(win_size, win_sigma)
    band_w = _band_block(g, tkw, LANE)              # (tkw, 128)    right-mult
    band_h = _band_block(g, tkh, tile_h).T          # (tile_h, tkh) left-mult
    # TODO(synk): optionally cast inputs/band blocks to bf16 for the MXU
    # (validate the sigma = blur(x*x) - mu^2 cancellation at rtol ~1e-3).

    FbHp = Fb * Hp
    FbHo = Fb * Ho_pad

    def kernel(p_ref, t_ref, bw_ref, bh_ref, l1_out, ss_out, zw_ref, bl_ref):
        c = pl.program_id(0)          # core / frame-half axis ("parallel")
        j = pl.program_id(1)          # chunk axis ("arbitrary", accumulates)

        @pl.when(j == 0)
        def _init():
            l1_out[...] = jnp.zeros_like(l1_out)
            ss_out[...] = jnp.zeros_like(ss_out)

        bw = bw_ref[...]              # (tkw, 128)
        bh = bh_ref[...]              # (tile_h, tkh)
        x = p_ref[...]                # (Fb, Hp, Wp), zero padded
        y = t_ref[...]

        # ----- L1 partial sums (padding is zero in both inputs -> adds 0) --
        d = jnp.abs(x - y)
        l1_out[...] += d.reshape(FbHp // 8, 8, Wp).sum(axis=0).reshape(1, 8, Wp)

        # ----- band-blocked separable Gaussian blur of the 5 SSIM maps -----
        def blur_into(m, zm):
            # stage 1: blur along W; (frame, row) folded into the matmul M dim
            zm2 = zm.reshape(FbHp, Wp)
            for t in range(Tw):
                zw_ref[:, t * LANE:(t + 1) * LANE] = jnp.dot(
                    zm2[:, t * LANE:t * LANE + tkw], bw,
                    preferred_element_type=jnp.float32)
            # stage 2: blur along H, one band block per output row tile
            for f in range(Fb):
                for s in range(Th):
                    src = zw_ref[f * Hp + s * tile_h:
                                 f * Hp + s * tile_h + tkh, :]
                    r0 = (m * Fb + f) * Ho_pad + s * tile_h
                    bl_ref[r0:r0 + tile_h, :] = jnp.dot(
                        bh, src, preferred_element_type=jnp.float32)

        blur_into(0, x)
        blur_into(1, y)
        blur_into(2, x * x)
        blur_into(3, y * y)
        blur_into(4, x * y)

        mu1 = bl_ref[0 * FbHo:1 * FbHo, :]
        mu2 = bl_ref[1 * FbHo:2 * FbHo, :]
        e_xx = bl_ref[2 * FbHo:3 * FbHo, :]
        e_yy = bl_ref[3 * FbHo:4 * FbHo, :]
        e_xy = bl_ref[4 * FbHo:5 * FbHo, :]

        mu1_sq = mu1 * mu1
        mu2_sq = mu2 * mu2
        mu1_mu2 = mu1 * mu2
        s1 = e_xx - mu1_sq
        s2 = e_yy - mu2_sq
        s12 = e_xy - mu1_mu2

        # one EUP reciprocal instead of two divisions (cs_map never needed).
        num = (2.0 * mu1_mu2 + C1) * (2.0 * s12 + C2)
        den = (mu1_sq + mu2_sq + C1) * (s1 + s2 + C2)
        ssim_map = num * pl.reciprocal(den, approx=True)   # (FbHo, Wo_pad)

        # ----- mask padded rows / cols / frames, then accumulate -----------
        ssim_map = ssim_map.reshape(Fb, Ho_pad, Wo_pad)
        row_ok = lax.broadcasted_iota(jnp.int32, (Ho_pad, Wo_pad), 0) < Ho
        col_ok = lax.broadcasted_iota(jnp.int32, (Ho_pad, Wo_pad), 1) < Wo
        cell_mask = jnp.where(row_ok & col_ok, 1.0, 0.0)         # f32 (Ho_pad, Wo_pad)
        chunk = c * chunks + j
        f_idx = chunk * Fb + lax.broadcasted_iota(jnp.int32, (Fb, 1, 1), 0)
        frame_mask = jnp.where(f_idx < frames, 1.0, 0.0)         # f32 (Fb, 1, 1)
        ssim_map = ssim_map * cell_mask[None] * frame_mask

        ss_out[...] += ssim_map.reshape(FbHo // 8, 8, Wo_pad).sum(
            axis=0).reshape(1, 8, Wo_pad)

    grid_spec = pltpu.PrefetchScalarGridSpec(
        num_scalar_prefetch=0,
        grid=(NCORES, chunks),
        in_specs=[
            pl.BlockSpec((Fb, Hp, Wp), lambda c, j: (c * chunks + j, 0, 0)),
            pl.BlockSpec((Fb, Hp, Wp), lambda c, j: (c * chunks + j, 0, 0)),
            pl.BlockSpec((tkw, LANE), lambda c, j: (0, 0)),
            pl.BlockSpec((tile_h, tkh), lambda c, j: (0, 0)),
        ],
        out_specs=[
            pl.BlockSpec((1, 8, Wp), lambda c, j: (c, 0, 0)),
            pl.BlockSpec((1, 8, Wo_pad), lambda c, j: (c, 0, 0)),
        ],
        scratch_shapes=[
            pltpu.VMEM((FbHp, Wo_pad), jnp.float32),       # row-blurred maps
            pltpu.VMEM((5 * FbHo, Wo_pad), jnp.float32),   # fully blurred maps
        ],
    )

    l1_part, ssim_part = pl.pallas_call(
        kernel,
        out_shape=(jax.ShapeDtypeStruct((NCORES, 8, Wp), jnp.float32),
                   jax.ShapeDtypeStruct((NCORES, 8, Wo_pad), jnp.float32)),
        grid_spec=grid_spec,
        compiler_params=pltpu.CompilerParams(
            dimension_semantics=("parallel", "arbitrary"),
            vmem_limit_bytes=vmem_limit),
    )(pred_f, tgt_f, band_w, band_h)

    # cross-lane / cross-core reduce and all constant scaling happen once here
    l1_loss = jnp.sum(l1_part) / float(frames * H * W)
    ssim_mean = jnp.sum(ssim_part) / float(frames * Ho * Wo)
    ssim_loss = 1.0 - ssim_mean
    return alpha * ssim_loss + (1.0 - alpha) * l1_loss


# ------------------------------- reference ---------------------------------
def _valid_conv_matrix(g, n):
    win = g.shape[0]
    no = n - win + 1
    rows = jnp.arange(no)[:, None]
    cols = jnp.arange(n)[None, :]
    idx = cols - rows
    mask = (idx >= 0) & (idx < win)
    return jnp.where(mask, g[jnp.clip(idx, 0, win - 1)], 0.0).astype(jnp.float32)


def _reference_loss(pred, target, *, alpha=0.8, data_range=1.0,
                    win_size=11, win_sigma=1.5, K=(0.01, 0.03)):
    # Pure-JAX reference (same math as pytorch_msssim SSIM + L1, no Pallas).
    B, T, H, W = pred.shape
    g = _gaussian_1d(win_size, win_sigma)
    GH = _valid_conv_matrix(g, H)
    GW = _valid_conv_matrix(g, W)
    C1 = (K[0] * data_range) ** 2
    C2 = (K[1] * data_range) ** 2

    def blur(z):  # z: (F, H, W)
        return jnp.einsum('oh,fhw,pw->fop', GH, z, GW)

    x = pred.reshape(B * T, H, W).astype(jnp.float32)
    y = target.reshape(B * T, H, W).astype(jnp.float32)
    mu1, mu2 = blur(x), blur(y)
    s1 = blur(x * x) - mu1 * mu1
    s2 = blur(y * y) - mu2 * mu2
    s12 = blur(x * y) - mu1 * mu2
    cs = (2 * s12 + C2) / (s1 + s2 + C2)
    ssim_map = ((2 * mu1 * mu2 + C1) / (mu1 * mu1 + mu2 * mu2 + C1)) * cs
    ssim_per_frame = ssim_map.reshape(B * T, -1).mean(-1)
    ssim_loss = 1.0 - ssim_per_frame.mean()
    l1 = jnp.mean(jnp.abs(x - y))
    return alpha * ssim_loss + (1 - alpha) * l1


if __name__ == "__main__":
    key = jax.random.PRNGKey(0)
    loss_fn = jax.jit(functools.partial(combined_loss, alpha=0.8))

    # Small shape consistent with the module (B=2, T=4, 16x16 frames).
    k1, k2 = jax.random.split(key)
    B, T, H, W = 2, 4, 16, 16
    pred = jax.random.uniform(k1, (B, T, H, W), dtype=jnp.float32)
    target = jax.random.uniform(k2, (B, T, H, W), dtype=jnp.float32)
    loss = jax.block_until_ready(loss_fn(pred, target))
    ref = _reference_loss(pred, target, alpha=0.8)
    # tolerance deliberately loosened vs exact division: approx EUP reciprocal.
    assert jnp.allclose(loss, ref, rtol=2e-3, atol=2e-3), (loss, ref)

    # Second shape exercising the multi-tile (banded) path along both H and W.
    k3, k4 = jax.random.split(k1)
    pred2 = jax.random.uniform(k3, (1, 2, 150, 140), dtype=jnp.float32)
    target2 = jax.random.uniform(k4, (1, 2, 150, 140), dtype=jnp.float32)
    loss2 = jax.block_until_ready(loss_fn(pred2, target2))
    ref2 = _reference_loss(pred2, target2, alpha=0.8)
    assert jnp.allclose(loss2, ref2, rtol=2e-3, atol=2e-3), (loss2, ref2)

    print("KERNEL_OK")
</pallas_src>

<mosaic_0001>
module attributes {stable_mosaic.version = 11 : i64} {
  func.func @kernel(%arg0: i32, %arg1: i32, %arg2: memref<4x16x128xf32, #tpu.memory_space<vmem>>, %arg3: memref<4x16x128xf32, #tpu.memory_space<vmem>>, %arg4: memref<128x128xf32, #tpu.memory_space<vmem>>, %arg5: memref<8x16xf32, #tpu.memory_space<vmem>>, %arg6: memref<1x8x128xf32, #tpu.memory_space<vmem>>, %arg7: memref<1x8x128xf32, #tpu.memory_space<vmem>>, %arg8: memref<64x128xf32, #tpu.memory_space<vmem>>, %arg9: memref<160x128xf32, #tpu.memory_space<vmem>>) attributes {dimension_semantics = [#tpu.dimension_semantics<parallel>, #tpu.dimension_semantics<arbitrary>], iteration_bounds = array<i64: 2, 1>, scalar_prefetch = 0 : i64, scratch_operands = 2 : i64, tpu.core_type = #tpu.core_type<tc>, window_params = [{transform_indices = @transform_0, window_bounds = array<i64: 4, 16, 128>}, {transform_indices = @transform_1, window_bounds = array<i64: 4, 16, 128>}, {pipeline_mode = #tpu.pipeline_mode<synchronous>, transform_indices = @transform_2, window_bounds = array<i64: 128, 128>}, {pipeline_mode = #tpu.pipeline_mode<synchronous>, transform_indices = @transform_3, window_bounds = array<i64: 8, 16>}, {transform_indices = @transform_4, window_bounds = array<i64: 1, 8, 128>}, {transform_indices = @transform_5, window_bounds = array<i64: 1, 8, 128>}]} {
    %c0_i32 = arith.constant 0 : i32
    %0 = arith.cmpi eq, %arg1, %c0_i32 : i32
    %1 = arith.extui %0 : i1 to i32
    %c0_i32_0 = arith.constant 0 : i32
    %2 = arith.cmpi ne, %1, %c0_i32_0 : i32
    scf.if %2 {
      %cst_140 = arith.constant 0.000000e+00 : f32
      %154 = vector.broadcast %cst_140 : f32 to vector<1x8x128xf32>
      %c0_141 = arith.constant 0 : index
      %c0_142 = arith.constant 0 : index
      %c0_143 = arith.constant 0 : index
      %155 = vector.load %arg6[%c0_141, %c0_142, %c0_143] : memref<1x8x128xf32, #tpu.memory_space<vmem>>, vector<1x8x128xf32>
      tpu.vector_store %arg6[%c0_141, %c0_142, %c0_143], %154 {strides = array<i32>} : memref<1x8x128xf32, #tpu.memory_space<vmem>>, vector<1x8x128xf32>,
      %cst_144 = arith.constant 0.000000e+00 : f32
      %156 = vector.broadcast %cst_144 : f32 to vector<1x8x128xf32>
      %c0_145 = arith.constant 0 : index
      %c0_146 = arith.constant 0 : index
      %c0_147 = arith.constant 0 : index
      %157 = vector.load %arg7[%c0_145, %c0_146, %c0_147] : memref<1x8x128xf32, #tpu.memory_space<vmem>>, vector<1x8x128xf32>
      tpu.vector_store %arg7[%c0_145, %c0_146, %c0_147], %156 {strides = array<i32>} : memref<1x8x128xf32, #tpu.memory_space<vmem>>, vector<1x8x128xf32>,
    } else {
    }
    %c0 = arith.constant 0 : index
    %c0_1 = arith.constant 0 : index
    %3 = vector.load %arg4[%c0, %c0_1] : memref<128x128xf32, #tpu.memory_space<vmem>>, vector<128x128xf32>
    %c0_2 = arith.constant 0 : index
    %c0_3 = arith.constant 0 : index
    %4 = vector.load %arg5[%c0_2, %c0_3] : memref<8x16xf32, #tpu.memory_space<vmem>>, vector<8x16xf32>
    %c0_4 = arith.constant 0 : index
    %c0_5 = arith.constant 0 : index
    %c0_6 = arith.constant 0 : index
    %5 = vector.load %arg2[%c0_4, %c0_5, %c0_6] : memref<4x16x128xf32, #tpu.memory_space<vmem>>, vector<4x16x128xf32>
    %c0_7 = arith.constant 0 : index
    %c0_8 = arith.constant 0 : index
    %c0_9 = arith.constant 0 : index
    %6 = vector.load %arg3[%c0_7, %c0_8, %c0_9] : memref<4x16x128xf32, #tpu.memory_space<vmem>>, vector<4x16x128xf32>
    %7 = arith.subf %5, %6 : vector<4x16x128xf32>
    %8 = math.absf %7 : vector<4x16x128xf32>
    %c0_10 = arith.constant 0 : index
    %c0_11 = arith.constant 0 : index
    %c0_12 = arith.constant 0 : index
    %9 = vector.load %arg6[%c0_10, %c0_11, %c0_12] : memref<1x8x128xf32, #tpu.memory_space<vmem>>, vector<1x8x128xf32>
    %10 = vector.shape_cast %8 : vector<4x16x128xf32> to vector<8x8x128xf32>
    %cst = arith.constant dense<0.000000e+00> : vector<8x128xf32>
    %11 = vector.multi_reduction <add>, %10, %cst [0] : vector<8x8x128xf32> to vector<8x128xf32>
    %12 = vector.shape_cast %11 : vector<8x128xf32> to vector<1x8x128xf32>
    %13 = arith.addf %9, %12 : vector<1x8x128xf32>
    %c0_13 = arith.constant 0 : index
    %c0_14 = arith.constant 0 : index
    %c0_15 = arith.constant 0 : index
    %14 = vector.load %arg6[%c0_13, %c0_14, %c0_15] : memref<1x8x128xf32, #tpu.memory_space<vmem>>, vector<1x8x128xf32>
    tpu.vector_store %arg6[%c0_13, %c0_14, %c0_15], %13 {strides = array<i32>} : memref<1x8x128xf32, #tpu.memory_space<vmem>>, vector<1x8x128xf32>,
    %15 = vector.shape_cast %5 : vector<4x16x128xf32> to vector<64x128xf32>
    %cst_16 = arith.constant dense<0.000000e+00> : vector<64x128xf32>
    %16 = tpu.matmul %15, %3, %cst_16 {dimension_numbers = #tpu.dot_dimension_numbers<[1], [0], [0], [1], [0, 0, 1, 1], [], []>} : vector<64x128xf32>, vector<128x128xf32>, vector<64x128xf32> -> vector<64x128xf32>
    %c0_17 = arith.constant 0 : index
    %c0_18 = arith.constant 0 : index
    %17 = vector.load %arg8[%c0_17, %c0_18] : memref<64x128xf32, #tpu.memory_space<vmem>>, vector<64x128xf32>
    tpu.vector_store %arg8[%c0_17, %c0_18], %16 {strides = array<i32>} : memref<64x128xf32, #tpu.memory_space<vmem>>, vector<64x128xf32>,
    %c0_19 = arith.constant 0 : index
    %c0_20 = arith.constant 0 : index
    %18 = vector.load %arg8[%c0_19, %c0_20] : memref<64x128xf32, #tpu.memory_space<vmem>>, vector<16x128xf32>
    %cst_21 = arith.constant dense<0.000000e+00> : vector<8x128xf32>
    %19 = tpu.matmul %4, %18, %cst_21 {dimension_numbers = #tpu.dot_dimension_numbers<[1], [0], [0], [1], [0, 0, 1, 1], [], []>} : vector<8x16xf32>, vector<16x128xf32>, vector<8x128xf32> -> vector<8x128xf32>
    %c0_22 = arith.constant 0 : index
    %c0_23 = arith.constant 0 : index
    %20 = vector.load %arg9[%c0_22, %c0_23] : memref<160x128xf32, #tpu.memory_space<vmem>>, vector<8x128xf32>
    tpu.vector_store %arg9[%c0_22, %c0_23], %19 {strides = array<i32>} : memref<160x128xf32, #tpu.memory_space<vmem>>, vector<8x128xf32>,
    %c16 = arith.constant 16 : index
    %c0_24 = arith.constant 0 : index
    %21 = vector.load %arg8[%c16, %c0_24] : memref<64x128xf32, #tpu.memory_space<vmem>>, vector<16x128xf32>
    %cst_25 = arith.constant dense<0.000000e+00> : vector<8x128xf32>
    %22 = tpu.matmul %4, %21, %cst_25 {dimension_numbers = #tpu.dot_dimension_numbers<[1], [0], [0], [1], [0, 0, 1, 1], [], []>} : vector<8x16xf32>, vector<16x128xf32>, vector<8x128xf32> -> vector<8x128xf32>
    %c8 = arith.constant 8 : index
    %c0_26 = arith.constant 0 : index
    %23 = vector.load %arg9[%c8, %c0_26] : memref<160x128xf32, #tpu.memory_space<vmem>>, vector<8x128xf32>
    tpu.vector_store %arg9[%c8, %c0_26], %22 {strides = array<i32>} : memref<160x128xf32, #tpu.memory_space<vmem>>, vector<8x128xf32>,
    %c32 = arith.constant 32 : index
    %c0_27 = arith.constant 0 : index
    %24 = vector.load %arg8[%c32, %c0_27] : memref<64x128xf32, #tpu.memory_space<vmem>>, vector<16x128xf32>
    %cst_28 = arith.constant dense<0.000000e+00> : vector<8x128xf32>
    %25 = tpu.matmul %4, %24, %cst_28 {dimension_numbers = #tpu.dot_dimension_numbers<[1], [0], [0], [1], [0, 0, 1, 1], [], []>} : vector<8x16xf32>, vector<16x128xf32>, vector<8x128xf32> -> vector<8x128xf32>
    %c16_29 = arith.constant 16 : index
    %c0_30 = arith.constant 0 : index
    %26 = vector.load %arg9[%c16_29, %c0_30] : memref<160x128xf32, #tpu.memory_space<vmem>>, vector<8x128xf32>
    tpu.vector_store %arg9[%c16_29, %c0_30], %25 {strides = array<i32>} : memref<160x128xf32, #tpu.memory_space<vmem>>, vector<8x128xf32>,
    %c48 = arith.constant 48 : index
    %c0_31 = arith.constant 0 : index
    %27 = vector.load %arg8[%c48, %c0_31] : memref<64x128xf32, #tpu.memory_space<vmem>>, vector<16x128xf32>
    %cst_32 = arith.constant dense<0.000000e+00> : vector<8x128xf32>
    %28 = tpu.matmul %4, %27, %cst_32 {dimension_numbers = #tpu.dot_dimension_numbers<[1], [0], [0], [1], [0, 0, 1, 1], [], []>} : vector<8x16xf32>, vector<16x128xf32>, vector<8x128xf32> -> vector<8x128xf32>
    %c24 = arith.constant 24 : index
    %c0_33 = arith.constant 0 : index
    %29 = vector.load %arg9[%c24, %c0_33] : memref<160x128xf32, #tpu.memory_space<vmem>>, vector<8x128xf32>
    tpu.vector_store %arg9[%c24, %c0_33], %28 {strides = array<i32>} : memref<160x128xf32, #tpu.memory_space<vmem>>, vector<8x128xf32>,
    %30 = vector.shape_cast %6 : vector<4x16x128xf32> to vector<64x128xf32>
    %cst_34 = arith.constant dense<0.000000e+00> : vector<64x128xf32>
    %31 = tpu.matmul %30, %3, %cst_34 {dimension_numbers = #tpu.dot_dimension_numbers<[1], [0], [0], [1], [0, 0, 1, 1], [], []>} : vector<64x128xf32>, vector<128x128xf32>, vector<64x128xf32> -> vector<64x128xf32>
    %c0_35 = arith.constant 0 : index
    %c0_36 = arith.constant 0 : index
    %32 = vector.load %arg8[%c0_35, %c0_36] : memref<64x128xf32, #tpu.memory_space<vmem>>, vector<64x128xf32>
    tpu.vector_store %arg8[%c0_35, %c0_36], %31 {strides = array<i32>} : memref<64x128xf32, #tpu.memory_space<vmem>>, vector<64x128xf32>,
    %c0_37 = arith.constant 0 : index
    %c0_38 = arith.constant 0 : index
    %33 = vector.load %arg8[%c0_37, %c0_38] : memref<64x128xf32, #tpu.memory_space<vmem>>, vector<16x128xf32>
    %cst_39 = arith.constant dense<0.000000e+00> : vector<8x128xf32>
    %34 = tpu.matmul %4, %33, %cst_39 {dimension_numbers = #tpu.dot_dimension_numbers<[1], [0], [0], [1], [0, 0, 1, 1], [], []>} : vector<8x16xf32>, vector<16x128xf32>, vector<8x128xf32> -> vector<8x128xf32>
    %c32_40 = arith.constant 32 : index
    %c0_41 = arith.constant 0 : index
    %35 = vector.load %arg9[%c32_40, %c0_41] : memref<160x128xf32, #tpu.memory_space<vmem>>, vector<8x128xf32>
    tpu.vector_store %arg9[%c32_40, %c0_41], %34 {strides = array<i32>} : memref<160x128xf32, #tpu.memory_space<vmem>>, vector<8x128xf32>,
    %c16_42 = arith.constant 16 : index
    %c0_43 = arith.constant 0 : index
    %36 = vector.load %arg8[%c16_42, %c0_43] : memref<64x128xf32, #tpu.memory_space<vmem>>, vector<16x128xf32>
    %cst_44 = arith.constant dense<0.000000e+00> : vector<8x128xf32>
    %37 = tpu.matmul %4, %36, %cst_44 {dimension_numbers = #tpu.dot_dimension_numbers<[1], [0], [0], [1], [0, 0, 1, 1], [], []>} : vector<8x16xf32>, vector<16x128xf32>, vector<8x128xf32> -> vector<8x128xf32>
    %c40 = arith.constant 40 : index
    %c0_45 = arith.constant 0 : index
    %38 = vector.load %arg9[%c40, %c0_45] : memref<160x128xf32, #tpu.memory_space<vmem>>, vector<8x128xf32>
    tpu.vector_store %arg9[%c40, %c0_45], %37 {strides = array<i32>} : memref<160x128xf32, #tpu.memory_space<vmem>>, vector<8x128xf32>,
    %c32_46 = arith.constant 32 : index
    %c0_47 = arith.constant 0 : index
    %39 = vector.load %arg8[%c32_46, %c0_47] : memref<64x128xf32, #tpu.memory_space<vmem>>, vector<16x128xf32>
    %cst_48 = arith.constant dense<0.000000e+00> : vector<8x128xf32>
    %40 = tpu.matmul %4, %39, %cst_48 {dimension_numbers = #tpu.dot_dimension_numbers<[1], [0], [0], [1], [0, 0, 1, 1], [], []>} : vector<8x16xf32>, vector<16x128xf32>, vector<8x128xf32> -> vector<8x128xf32>
    %c48_49 = arith.constant 48 : index
    %c0_50 = arith.constant 0 : index
    %41 = vector.load %arg9[%c48_49, %c0_50] : memref<160x128xf32, #tpu.memory_space<vmem>>, vector<8x128xf32>
    tpu.vector_store %arg9[%c48_49, %c0_50], %40 {strides = array<i32>} : memref<160x128xf32, #tpu.memory_space<vmem>>, vector<8x128xf32>,
    %c48_51 = arith.constant 48 : index
    %c0_52 = arith.constant 0 : index
    %42 = vector.load %arg8[%c48_51, %c0_52] : memref<64x128xf32, #tpu.memory_space<vmem>>, vector<16x128xf32>
    %cst_53 = arith.constant dense<0.000000e+00> : vector<8x128xf32>
    %43 = tpu.matmul %4, %42, %cst_53 {dimension_numbers = #tpu.dot_dimension_numbers<[1], [0], [0], [1], [0, 0, 1, 1], [], []>} : vector<8x16xf32>, vector<16x128xf32>, vector<8x128xf32> -> vector<8x128xf32>
    %c56 = arith.constant 56 : index
    %c0_54 = arith.constant 0 : index
    %44 = vector.load %arg9[%c56, %c0_54] : memref<160x128xf32, #tpu.memory_space<vmem>>, vector<8x128xf32>
    tpu.vector_store %arg9[%c56, %c0_54], %43 {strides = array<i32>} : memref<160x128xf32, #tpu.memory_space<vmem>>, vector<8x128xf32>,
    %45 = arith.mulf %5, %5 : vector<4x16x128xf32>
    %46 = vector.shape_cast %45 : vector<4x16x128xf32> to vector<64x128xf32>
    %cst_55 = arith.constant dense<0.000000e+00> : vector<64x128xf32>
    %47 = tpu.matmul %46, %3, %cst_55 {dimension_numbers = #tpu.dot_dimension_numbers<[1], [0], [0], [1], [0, 0, 1, 1], [], []>} : vector<64x128xf32>, vector<128x128xf32>, vector<64x128xf32> -> vector<64x128xf32>
    %c0_56 = arith.constant 0 : index
    %c0_57 = arith.constant 0 : index
    %48 = vector.load %arg8[%c0_56, %c0_57] : memref<64x128xf32, #tpu.memory_space<vmem>>, vector<64x128xf32>
    tpu.vector_store %arg8[%c0_56, %c0_57], %47 {strides = array<i32>} : memref<64x128xf32, #tpu.memory_space<vmem>>, vector<64x128xf32>,
    %c0_58 = arith.constant 0 : index
    %c0_59 = arith.constant 0 : index
    %49 = vector.load %arg8[%c0_58, %c0_59] : memref<64x128xf32, #tpu.memory_space<vmem>>, vector<16x128xf32>
    %cst_60 = arith.constant dense<0.000000e+00> : vector<8x128xf32>
    %50 = tpu.matmul %4, %49, %cst_60 {dimension_numbers = #tpu.dot_dimension_numbers<[1], [0], [0], [1], [0, 0, 1, 1], [], []>} : vector<8x16xf32>, vector<16x128xf32>, vector<8x128xf32> -> vector<8x128xf32>
    %c64 = arith.constant 64 : index
    %c0_61 = arith.constant 0 : index
    %51 = vector.load %arg9[%c64, %c0_61] : memref<160x128xf32, #tpu.memory_space<vmem>>, vector<8x128xf32>
    tpu.vector_store %arg9[%c64, %c0_61], %50 {strides = array<i32>} : memref<160x128xf32, #tpu.memory_space<vmem>>, vector<8x128xf32>,
    %c16_62 = arith.constant 16 : index
    %c0_63 = arith.constant 0 : index
    %52 = vector.load %arg8[%c16_62, %c0_63] : memref<64x128xf32, #tpu.memory_space<vmem>>, vector<16x128xf32>
    %cst_64 = arith.constant dense<0.000000e+00> : vector<8x128xf32>
    %53 = tpu.matmul %4, %52, %cst_64 {dimension_numbers = #tpu.dot_dimension_numbers<[1], [0], [0], [1], [0, 0, 1, 1], [], []>} : vector<8x16xf32>, vector<16x128xf32>, vector<8x128xf32> -> vector<8x128xf32>
    %c72 = arith.constant 72 : index
    %c0_65 = arith.constant 0 : index
    %54 = vector.load %arg9[%c72, %c0_65] : memref<160x128xf32, #tpu.memory_space<vmem>>, vector<8x128xf32>
    tpu.vector_store %arg9[%c72, %c0_65], %53 {strides = array<i32>} : memref<160x128xf32, #tpu.memory_space<vmem>>, vector<8x128xf32>,
    %c32_66 = arith.constant 32 : index
    %c0_67 = arith.constant 0 : index
    %55 = vector.load %arg8[%c32_66, %c0_67] : memref<64x128xf32, #tpu.memory_space<vmem>>, vector<16x128xf32>
    %cst_68 = arith.constant dense<0.000000e+00> : vector<8x128xf32>
    %56 = tpu.matmul %4, %55, %cst_68 {dimension_numbers = #tpu.dot_dimension_numbers<[1], [0], [0], [1], [0, 0, 1, 1], [], []>} : vector<8x16xf32>, vector<16x128xf32>, vector<8x128xf32> -> vector<8x128xf32>
    %c80 = arith.constant 80 : index
    %c0_69 = arith.constant 0 : index
    %57 = vector.load %arg9[%c80, %c0_69] : memref<160x128xf32, #tpu.memory_space<vmem>>, vector<8x128xf32>
    tpu.vector_store %arg9[%c80, %c0_69], %56 {strides = array<i32>} : memref<160x128xf32, #tpu.memory_space<vmem>>, vector<8x128xf32>,
    %c48_70 = arith.constant 48 : index
    %c0_71 = arith.constant 0 : index
    %58 = vector.load %arg8[%c48_70, %c0_71] : memref<64x128xf32, #tpu.memory_space<vmem>>, vector<16x128xf32>
    %cst_72 = arith.constant dense<0.000000e+00> : vector<8x128xf32>
    %59 = tpu.matmul %4, %58, %cst_72 {dimension_numbers = #tpu.dot_dimension_numbers<[1], [0], [0], [1], [0, 0, 1, 1], [], []>} : vector<8x16xf32>, vector<16x128xf32>, vector<8x128xf32> -> vector<8x128xf32>
    %c88 = arith.constant 88 : index
    %c0_73 = arith.constant 0 : index
    %60 = vector.load %arg9[%c88, %c0_73] : memref<160x128xf32, #tpu.memory_space<vmem>>, vector<8x128xf32>
    tpu.vector_store %arg9[%c88, %c0_73], %59 {strides = array<i32>} : memref<160x128xf32, #tpu.memory_space<vmem>>, vector<8x128xf32>,
    %61 = arith.mulf %6, %6 : vector<4x16x128xf32>
    %62 = vector.shape_cast %61 : vector<4x16x128xf32> to vector<64x128xf32>
    %cst_74 = arith.constant dense<0.000000e+00> : vector<64x128xf32>
    %63 = tpu.matmul %62, %3, %cst_74 {dimension_numbers = #tpu.dot_dimension_numbers<[1], [0], [0], [1], [0, 0, 1, 1], [], []>} : vector<64x128xf32>, vector<128x128xf32>, vector<64x128xf32> -> vector<64x128xf32>
    %c0_75 = arith.constant 0 : index
    %c0_76 = arith.constant 0 : index
    %64 = vector.load %arg8[%c0_75, %c0_76] : memref<64x128xf32, #tpu.memory_space<vmem>>, vector<64x128xf32>
    tpu.vector_store %arg8[%c0_75, %c0_76], %63 {strides = array<i32>} : memref<64x128xf32, #tpu.memory_space<vmem>>, vector<64x128xf32>,
    %c0_77 = arith.constant 0 : index
    %c0_78 = arith.constant 0 : index
    %65 = vector.load %arg8[%c0_77, %c0_78] : memref<64x128xf32, #tpu.memory_space<vmem>>, vector<16x128xf32>
    %cst_79 = arith.constant dense<0.000000e+00> : vector<8x128xf32>
    %66 = tpu.matmul %4, %65, %cst_79 {dimension_numbers = #tpu.dot_dimension_numbers<[1], [0], [0], [1], [0, 0, 1, 1], [], []>} : vector<8x16xf32>, vector<16x128xf32>, vector<8x128xf32> -> vector<8x128xf32>
    %c96 = arith.constant 96 : index
    %c0_80 = arith.constant 0 : index
    %67 = vector.load %arg9[%c96, %c0_80] : memref<160x128xf32, #tpu.memory_space<vmem>>, vector<8x128xf32>
    tpu.vector_store %arg9[%c96, %c0_80], %66 {strides = array<i32>} : memref<160x128xf32, #tpu.memory_space<vmem>>, vector<8x128xf32>,
    %c16_81 = arith.constant 16 : index
    %c0_82 = arith.constant 0 : index
    %68 = vector.load %arg8[%c16_81, %c0_82] : memref<64x128xf32, #tpu.memory_space<vmem>>, vector<16x128xf32>
    %cst_83 = arith.constant dense<0.000000e+00> : vector<8x128xf32>
    %69 = tpu.matmul %4, %68, %cst_83 {dimension_numbers = #tpu.dot_dimension_numbers<[1], [0], [0], [1], [0, 0, 1, 1], [], []>} : vector<8x16xf32>, vector<16x128xf32>, vector<8x128xf32> -> vector<8x128xf32>
    %c104 = arith.constant 104 : index
    %c0_84 = arith.constant 0 : index
    %70 = vector.load %arg9[%c104, %c0_84] : memref<160x128xf32, #tpu.memory_space<vmem>>, vector<8x128xf32>
    tpu.vector_store %arg9[%c104, %c0_84], %69 {strides = array<i32>} : memref<160x128xf32, #tpu.memory_space<vmem>>, vector<8x128xf32>,
    %c32_85 = arith.constant 32 : index
    %c0_86 = arith.constant 0 : index
    %71 = vector.load %arg8[%c32_85, %c0_86] : memref<64x128xf32, #tpu.memory_space<vmem>>, vector<16x128xf32>
    %cst_87 = arith.constant dense<0.000000e+00> : vector<8x128xf32>
    %72 = tpu.matmul %4, %71, %cst_87 {dimension_numbers = #tpu.dot_dimension_numbers<[1], [0], [0], [1], [0, 0, 1, 1], [], []>} : vector<8x16xf32>, vector<16x128xf32>, vector<8x128xf32> -> vector<8x128xf32>
    %c112 = arith.constant 112 : index
    %c0_88 = arith.constant 0 : index
    %73 = vector.load %arg9[%c112, %c0_88] : memref<160x128xf32, #tpu.memory_space<vmem>>, vector<8x128xf32>
    tpu.vector_store %arg9[%c112, %c0_88], %72 {strides = array<i32>} : memref<160x128xf32, #tpu.memory_space<vmem>>, vector<8x128xf32>,
    %c48_89 = arith.constant 48 : index
    %c0_90 = arith.constant 0 : index
    %74 = vector.load %arg8[%c48_89, %c0_90] : memref<64x128xf32, #tpu.memory_space<vmem>>, vector<16x128xf32>
    %cst_91 = arith.constant dense<0.000000e+00> : vector<8x128xf32>
    %75 = tpu.matmul %4, %74, %cst_91 {dimension_numbers = #tpu.dot_dimension_numbers<[1], [0], [0], [1], [0, 0, 1, 1], [], []>} : vector<8x16xf32>, vector<16x128xf32>, vector<8x128xf32> -> vector<8x128xf32>
    %c120 = arith.constant 120 : index
    %c0_92 = arith.constant 0 : index
    %76 = vector.load %arg9[%c120, %c0_92] : memref<160x128xf32, #tpu.memory_space<vmem>>, vector<8x128xf32>
    tpu.vector_store %arg9[%c120, %c0_92], %75 {strides = array<i32>} : memref<160x128xf32, #tpu.memory_space<vmem>>, vector<8x128xf32>,
    %77 = arith.mulf %5, %6 : vector<4x16x128xf32>
    %78 = vector.shape_cast %77 : vector<4x16x128xf32> to vector<64x128xf32>
    %cst_93 = arith.constant dense<0.000000e+00> : vector<64x128xf32>
    %79 = tpu.matmul %78, %3, %cst_93 {dimension_numbers = #tpu.dot_dimension_numbers<[1], [0], [0], [1], [0, 0, 1, 1], [], []>} : vector<64x128xf32>, vector<128x128xf32>, vector<64x128xf32> -> vector<64x128xf32>
    %c0_94 = arith.constant 0 : index
    %c0_95 = arith.constant 0 : index
    %80 = vector.load %arg8[%c0_94, %c0_95] : memref<64x128xf32, #tpu.memory_space<vmem>>, vector<64x128xf32>
    tpu.vector_store %arg8[%c0_94, %c0_95], %79 {strides = array<i32>} : memref<64x128xf32, #tpu.memory_space<vmem>>, vector<64x128xf32>,
    %c0_96 = arith.constant 0 : index
    %c0_97 = arith.constant 0 : index
    %81 = vector.load %arg8[%c0_96, %c0_97] : memref<64x128xf32, #tpu.memory_space<vmem>>, vector<16x128xf32>
    %cst_98 = arith.constant dense<0.000000e+00> : vector<8x128xf32>
    %82 = tpu.matmul %4, %81, %cst_98 {dimension_numbers = #tpu.dot_dimension_numbers<[1], [0], [0], [1], [0, 0, 1, 1], [], []>} : vector<8x16xf32>, vector<16x128xf32>, vector<8x128xf32> -> vector<8x128xf32>
    %c128 = arith.constant 128 : index
    %c0_99 = arith.constant 0 : index
    %83 = vector.load %arg9[%c128, %c0_99] : memref<160x128xf32, #tpu.memory_space<vmem>>, vector<8x128xf32>
    tpu.vector_store %arg9[%c128, %c0_99], %82 {strides = array<i32>} : memref<160x128xf32, #tpu.memory_space<vmem>>, vector<8x128xf32>,
    %c16_100 = arith.constant 16 : index
    %c0_101 = arith.constant 0 : index
    %84 = vector.load %arg8[%c16_100, %c0_101] : memref<64x128xf32, #tpu.memory_space<vmem>>, vector<16x128xf32>
    %cst_102 = arith.constant dense<0.000000e+00> : vector<8x128xf32>
    %85 = tpu.matmul %4, %84, %cst_102 {dimension_numbers = #tpu.dot_dimension_numbers<[1], [0], [0], [1], [0, 0, 1, 1], [], []>} : vector<8x16xf32>, vector<16x128xf32>, vector<8x128xf32> -> vector<8x128xf32>
    %c136 = arith.constant 136 : index
    %c0_103 = arith.constant 0 : index
    %86 = vector.load %arg9[%c136, %c0_103] : memref<160x128xf32, #tpu.memory_space<vmem>>, vector<8x128xf32>
    tpu.vector_store %arg9[%c136, %c0_103], %85 {strides = array<i32>} : memref<160x128xf32, #tpu.memory_space<vmem>>, vector<8x128xf32>,
    %c32_104 = arith.constant 32 : index
    %c0_105 = arith.constant 0 : index
    %87 = vector.load %arg8[%c32_104, %c0_105] : memref<64x128xf32, #tpu.memory_space<vmem>>, vector<16x128xf32>
    %cst_106 = arith.constant dense<0.000000e+00> : vector<8x128xf32>
    %88 = tpu.matmul %4, %87, %cst_106 {dimension_numbers = #tpu.dot_dimension_numbers<[1], [0], [0], [1], [0, 0, 1, 1], [], []>} : vector<8x16xf32>, vector<16x128xf32>, vector<8x128xf32> -> vector<8x128xf32>
    %c144 = arith.constant 144 : index
    %c0_107 = arith.constant 0 : index
    %89 = vector.load %arg9[%c144, %c0_107] : memref<160x128xf32, #tpu.memory_space<vmem>>, vector<8x128xf32>
    tpu.vector_store %arg9[%c144, %c0_107], %88 {strides = array<i32>} : memref<160x128xf32, #tpu.memory_space<vmem>>, vector<8x128xf32>,
    %c48_108 = arith.constant 48 : index
    %c0_109 = arith.constant 0 : index
    %90 = vector.load %arg8[%c48_108, %c0_109] : memref<64x128xf32, #tpu.memory_space<vmem>>, vector<16x128xf32>
    %cst_110 = arith.constant dense<0.000000e+00> : vector<8x128xf32>
    %91 = tpu.matmul %4, %90, %cst_110 {dimension_numbers = #tpu.dot_dimension_numbers<[1], [0], [0], [1], [0, 0, 1, 1], [], []>} : vector<8x16xf32>, vector<16x128xf32>, vector<8x128xf32> -> vector<8x128xf32>
    %c152 = arith.constant 152 : index
    %c0_111 = arith.constant 0 : index
    %92 = vector.load %arg9[%c152, %c0_111] : memref<160x128xf32, #tpu.memory_space<vmem>>, vector<8x128xf32>
    tpu.vector_store %arg9[%c152, %c0_111], %91 {strides = array<i32>} : memref<160x128xf32, #tpu.memory_space<vmem>>, vector<8x128xf32>,
    %c0_112 = arith.constant 0 : index
    %c0_113 = arith.constant 0 : index
    %93 = vector.load %arg9[%c0_112, %c0_113] : memref<160x128xf32, #tpu.memory_space<vmem>>, vector<32x128xf32>
    %c32_114 = arith.constant 32 : index
    %c0_115 = arith.constant 0 : index
    %94 = vector.load %arg9[%c32_114, %c0_115] : memref<160x128xf32, #tpu.memory_space<vmem>>, vector<32x128xf32>
    %c64_116 = arith.constant 64 : index
    %c0_117 = arith.constant 0 : index
    %95 = vector.load %arg9[%c64_116, %c0_117] : memref<160x128xf32, #tpu.memory_space<vmem>>, vector<32x128xf32>
    %c96_118 = arith.constant 96 : index
    %c0_119 = arith.constant 0 : index
    %96 = vector.load %arg9[%c96_118, %c0_119] : memref<160x128xf32, #tpu.memory_space<vmem>>, vector<32x128xf32>
    %c128_120 = arith.constant 128 : index
    %c0_121 = arith.constant 0 : index
    %97 = vector.load %arg9[%c128_120, %c0_121] : memref<160x128xf32, #tpu.memory_space<vmem>>, vector<32x128xf32>
    %98 = arith.mulf %93, %93 : vector<32x128xf32>
    %99 = arith.mulf %94, %94 : vector<32x128xf32>
    %100 = arith.mulf %93, %94 : vector<32x128xf32>
    %101 = arith.subf %95, %98 : vector<32x128xf32>
    %102 = arith.subf %96, %99 : vector<32x128xf32>
    %103 = arith.subf %97, %100 : vector<32x128xf32>
    %cst_122 = arith.constant 2.000000e+00 : f32
    %104 = vector.broadcast %cst_122 : f32 to vector<32x128xf32>
    %105 = arith.mulf %104, %100 : vector<32x128xf32>
    %cst_123 = arith.constant 9.99999974E-5 : f32
    %106 = vector.broadcast %cst_123 : f32 to vector<32x128xf32>
    %107 = arith.addf %105, %106 : vector<32x128xf32>
    %cst_124 = arith.constant 2.000000e+00 : f32
    %108 = vector.broadcast %cst_124 : f32 to vector<32x128xf32>
    %109 = arith.mulf %108, %103 : vector<32x128xf32>
    %cst_125 = arith.constant 8.99999984E-4 : f32
    %110 = vector.broadcast %cst_125 : f32 to vector<32x128xf32>
    %111 = arith.addf %109, %110 : vector<32x128xf32>
    %112 = arith.mulf %107, %111 : vector<32x128xf32>
    %113 = arith.addf %98, %99 : vector<32x128xf32>
    %cst_126 = arith.constant 9.99999974E-5 : f32
    %114 = vector.broadcast %cst_126 : f32 to vector<32x128xf32>
    %115 = arith.addf %113, %114 : vector<32x128xf32>
    %116 = arith.addf %101, %102 : vector<32x128xf32>
    %cst_127 = arith.constant 8.99999984E-4 : f32
    %117 = vector.broadcast %cst_127 : f32 to vector<32x128xf32>
    %118 = arith.addf %116, %117 : vector<32x128xf32>
    %119 = arith.mulf %115, %118 : vector<32x128xf32>
    %120 = tpu.reciprocal %119 {approx = true} : vector<32x128xf32> -> vector<32x128xf32>
    %121 = arith.mulf %112, %120 : vector<32x128xf32>
    %122 = vector.shape_cast %121 : vector<32x128xf32> to vector<4x8x128xf32>
    %123 = tpu.iota {dimensions = array<i32: 0>} : vector<8x128xi32>
    %c6_i32 = arith.constant 6 : i32
    %124 = vector.broadcast %c6_i32 : i32 to vector<8x128xi32>
    %125 = arith.cmpi slt, %123, %124 : vector<8x128xi32>
    %126 = tpu.iota {dimensions = array<i32: 1>} : vector<8x128xi32>
    %c6_i32_128 = arith.constant 6 : i32
    %127 = vector.broadcast %c6_i32_128 : i32 to vector<8x128xi32>
    %128 = arith.cmpi slt, %126, %127 : vector<8x128xi32>
    %129 = arith.andi %125, %128 : vector<8x128xi1>
    %cst_129 = arith.constant 1.000000e+00 : f32
    %cst_130 = arith.constant 0.000000e+00 : f32
    %130 = vector.broadcast %cst_129 : f32 to vector<8x128xf32>
    %131 = vector.broadcast %cst_130 : f32 to vector<8x128xf32>
    %132 = arith.select %129, %130, %131 : vector<8x128xi1>, vector<8x128xf32>
    %c1_i32 = arith.constant 1 : i32
    %133 = arith.muli %arg0, %c1_i32 : i32
    %134 = arith.addi %133, %arg1 : i32
    %c4_i32 = arith.constant 4 : i32
    %135 = arith.muli %134, %c4_i32 : i32
    %136 = tpu.iota {dimensions = array<i32: 0>} : vector<4x1x1xi32>
    %137 = vector.broadcast %135 : i32 to vector<4x1x1xi32>
    %138 = arith.addi %137, %136 : vector<4x1x1xi32>
    %c8_i32 = arith.constant 8 : i32
    %139 = vector.broadcast %c8_i32 : i32 to vector<4x1x1xi32>
    %140 = arith.cmpi slt, %138, %139 : vector<4x1x1xi32>
    %cst_131 = arith.constant 1.000000e+00 : f32
    %cst_132 = arith.constant 0.000000e+00 : f32
    %141 = vector.broadcast %cst_131 : f32 to vector<4x1x1xf32>
    %142 = vector.broadcast %cst_132 : f32 to vector<4x1x1xf32>
    %143 = arith.select %140, %141, %142 : vector<4x1x1xi1>, vector<4x1x1xf32>
    %144 = vector.shape_cast %132 : vector<8x128xf32> to vector<1x8x128xf32>
    %145 = vector.broadcast %144 : vector<1x8x128xf32> to vector<4x8x128xf32>
    %146 = arith.mulf %122, %145 : vector<4x8x128xf32>
    %147 = vector.broadcast %143 : vector<4x1x1xf32> to vector<4x8x128xf32>
    %148 = arith.mulf %146, %147 : vector<4x8x128xf32>
    %c0_133 = arith.constant 0 : index
    %c0_134 = arith.constant 0 : index
    %c0_135 = arith.constant 0 : index
    %149 = vector.load %arg7[%c0_133, %c0_134, %c0_135] : memref<1x8x128xf32, #tpu.memory_space<vmem>>, vector<1x8x128xf32>
    %cst_136 = arith.constant dense<0.000000e+00> : vector<8x128xf32>
    %150 = vector.multi_reduction <add>, %148, %cst_136 [0] : vector<4x8x128xf32> to vector<8x128xf32>
    %151 = vector.shape_cast %150 : vector<8x128xf32> to vector<1x8x128xf32>
    %152 = arith.addf %149, %151 : vector<1x8x128xf32>
    %c0_137 = arith.constant 0 : index
    %c0_138 = arith.constant 0 : index
    %c0_139 = arith.constant 0 : index
    %153 = vector.load %arg7[%c0_137, %c0_138, %c0_139] : memref<1x8x128xf32, #tpu.memory_space<vmem>>, vector<1x8x128xf32>
    tpu.vector_store %arg7[%c0_137, %c0_138, %c0_139], %152 {strides = array<i32>} : memref<1x8x128xf32, #tpu.memory_space<vmem>>, vector<1x8x128xf32>,
    return
  }
  func.func @transform_0(%arg0: i32, %arg1: i32) -> (i32, i32, i32) {
    %c1_i32 = arith.constant 1 : i32
    %0 = arith.muli %arg0, %c1_i32 : i32
    %1 = arith.addi %0, %arg1 : i32
    %c0_i32 = arith.constant 0 : i32
    %c0_i32_0 = arith.constant 0 : i32
    %c0_i32_1 = arith.constant 0 : i32
    return %1, %c0_i32, %c0_i32_0 : i32, i32, i32
  }
  func.func @transform_1(%arg0: i32, %arg1: i32) -> (i32, i32, i32) {
    %c1_i32 = arith.constant 1 : i32
    %0 = arith.muli %arg0, %c1_i32 : i32
    %1 = arith.addi %0, %arg1 : i32
    %c0_i32 = arith.constant 0 : i32
    %c0_i32_0 = arith.constant 0 : i32
    %c0_i32_1 = arith.constant 0 : i32
    return %1, %c0_i32, %c0_i32_0 : i32, i32, i32
  }
  func.func @transform_2(%arg0: i32, %arg1: i32) -> (i32, i32) {
    %c0_i32 = arith.constant 0 : i32
    %c0_i32_0 = arith.constant 0 : i32
    %c0_i32_1 = arith.constant 0 : i32
    return %c0_i32, %c0_i32_0 : i32, i32
  }
  func.func @transform_3(%arg0: i32, %arg1: i32) -> (i32, i32) {
    %c0_i32 = arith.constant 0 : i32
    %c0_i32_0 = arith.constant 0 : i32
    %c0_i32_1 = arith.constant 0 : i32
    return %c0_i32, %c0_i32_0 : i32, i32
  }
  func.func @transform_4(%arg0: i32, %arg1: i32) -> (i32, i32, i32) {
    %c0_i32 = arith.constant 0 : i32
    %c0_i32_0 = arith.constant 0 : i32
    %c0_i32_1 = arith.constant 0 : i32
    return %arg0, %c0_i32, %c0_i32_0 : i32, i32, i32
  }
  func.func @transform_5(%arg0: i32, %arg1: i32) -> (i32, i32, i32) {
    %c0_i32 = arith.constant 0 : i32
    %c0_i32_0 = arith.constant 0 : i32
    %c0_i32_1 = arith.constant 0 : i32
    return %arg0, %c0_i32, %c0_i32_0 : i32, i32, i32
  }
}

</mosaic_0001>

<llo_original>
// kernel: combined_loss.1
$region0: #{combined_loss.1}
  #allocation0 [shape = 'u32[]', space=smem, size = 0x4, offset = 0x4, fixed_abs, tag = 'smem constant byte address 0x4 - core index']
  #allocation1 [shape = 'u32[72,128]{1,0:T(1,128)}', space=vmem, size = 0x9000, scoped, tag = 'internal scratch']
  #allocation2 [shape = 'f32[64,128]{1,0:T(8,128)}', space=vmem, size = 0x8000, scoped, tag = 'scratch operand']
  #allocation3 [shape = 'f32[160,128]{1,0:T(8,128)}', space=vmem, size = 0x14000, scoped, tag = 'scratch operand']
  %s0 = inlined_call_operand.vmem [shape: f32[8,16,128], index: 0, kind: input, shape index: {}]
  %s1 = inlined_call_operand.vmem [shape: f32[8,16,128], index: 1, kind: input, shape index: {}]
  %s2 = inlined_call_operand.vmem [shape: f32[128,128], index: 2, kind: input, shape index: {}]
  %s3 = inlined_call_operand.vmem [shape: f32[8,16], index: 3, kind: input, shape index: {}]
  %s4 = inlined_call_operand.vmem [shape: f32[2,8,128], index: 4, kind: output, shape index: {0}]
  %s5 = inlined_call_operand.vmem [shape: f32[2,8,128], index: 5, kind: output, shape index: {1}]
  %6 = xla_tuple %s4, %s5
  %s7 = sld [smem:[#allocation0]]
  $region61: #{combined_loss.1} parent=0
    _
  %s9 = ssub.s32 1, %s7
  %s10 = scalar_select 0, %s9, %s7
  loop: start=0, step=1, limit=4
  $region2: #{combined_loss.1} parent=0 // loop_pre_header
    _
  $region3: #{combined_loss.1} parent=0 // loop_header
    %s12 = sphi 0, %s16
    %p13 = scmp.ge.s32.totalorder %s12, 4
    %s19 = sphi 0, %s31
    %s20 = sphi 0, %s27
    %s21 = sphi 0, %s19
    %s22 = sphi 0, %s20
    %s23 = sphi 0, %s21
    %s24 = sphi 0, %s22
    %s36 = sphi 0, %s38
    %s39 = sphi 0, %s36
    %s40 = sphi 0, %s39
    %s56 = sphi 0, %s40
    %s64 = sphi 0, %s66
    %s67 = sphi 0, %s64
    %s68 = sphi 0, %s67
    %s84 = sphi 0, %s68
    %s88 = sphi 0, %s88
    %s90 = sphi 0, %s88
    %s91 = sphi 0, %s90
    %s105 = sphi 0, %s91
    %s109 = sphi 0, %s109
    %s111 = sphi 0, %s109
    %s112 = sphi 0, %s111
    %s126 = sphi 0, %s112
    %s132 = sphi 0, %s134
    %s135 = sphi 0, %s132
    %s136 = sphi 0, %s135
    %s152 = sphi 0, %s136
    %s158 = sphi 0, %s160
    %s161 = sphi 0, %s158
    %s162 = sphi 0, %s161
    %s178 = sphi 0, %s162
  $region4: #{combined_loss.1} parent=0 // loop_header_branch
    %15 = sbr.rel (%p13) target = $region8
  $region5: #{combined_loss.1} parent=0 // loop_body
    %s17 = ssub.s32 %s12, 1
    %s18 = ssub.s32 %s12, 2
    %s25 = sadd.s32 1, %s20
    %p26 = scmp.ge.s32.totalorder %s25, 1
    %s27 = scalar_select %p26, 0, %s25
    %s28 = sadd.s32 1, %s19
    %s29 = scalar_select %p26, %s28, %s19
    %p30 = scmp.ge.s32.totalorder %s29, 2
    %s31 = scalar_select %p30, 0, %s29
    %s32 = sadd.s32 %s19, %s20
    %s33 = sadd.s32 %s31, %s27
    %s34 = ssub.s32 %s32, %s33
    %p35 = scmp.eq.s32.totalorder %s34, 0
    %s37 = sadd.s32 %s36, 1
    %s38 = scalar_select %p35, %s36, %s37
    %p41 = pneg %p35
    %p42 = scmp.eq.s32.totalorder %s12, 1
    %p43 = por %p41, %p42
    %p44 = scmp.ne.s32.totalorder %s36, %s39
    %p45 = scmp.eq.s32.totalorder %s12, 0
    %p46 = por %p44, %p45
    %p47 = scmp.ne.s32.totalorder %s36, %s39
    %p48 = scmp.eq.s32.totalorder %s17, 1
    %p49 = por %p47, %p48
    %p50 = scmp.ne.s32.totalorder %s39, %s40
    %p51 = scmp.eq.s32.totalorder %s17, 0
    %p52 = por %p50, %p51
    %p53 = scmp.ne.s32.totalorder %s39, %s40
    %p54 = scmp.eq.s32.totalorder %s18, 1
    %p55 = por %p53, %p54
    %p57 = scmp.ne.s32.totalorder %s40, %s56
    %p58 = scmp.eq.s32.totalorder %s18, 0
    %p59 = por %p57, %p58
    %s60 = sadd.s32 %s19, %s20
    %s61 = sadd.s32 %s31, %s27
    %s62 = ssub.s32 %s60, %s61
    %p63 = scmp.eq.s32.totalorder %s62, 0
    %s65 = sadd.s32 %s64, 1
    %s66 = scalar_select %p63, %s64, %s65
    %p69 = pneg %p63
    %p70 = scmp.eq.s32.totalorder %s12, 1
    %p71 = por %p69, %p70
    %p72 = scmp.ne.s32.totalorder %s64, %s67
    %p73 = scmp.eq.s32.totalorder %s12, 0
    %p74 = por %p72, %p73
    %p75 = scmp.ne.s32.totalorder %s64, %s67
    %p76 = scmp.eq.s32.totalorder %s17, 1
    %p77 = por %p75, %p76
    %p78 = scmp.ne.s32.totalorder %s67, %s68
    %p79 = scmp.eq.s32.totalorder %s17, 0
    %p80 = por %p78, %p79
    %p81 = scmp.ne.s32.totalorder %s67, %s68
    %p82 = scmp.eq.s32.totalorder %s18, 1
    %p83 = por %p81, %p82
    %p85 = scmp.ne.s32.totalorder %s68, %s84
    %p86 = scmp.eq.s32.totalorder %s18, 0
    %p87 = por %p85, %p86
    %s89 = sadd.s32 %s88, 1
    %p92 = scmp.eq.s32.totalorder %s12, 1
    %p93 = scmp.ne.s32.totalorder %s88, %s90
    %p94 = scmp.eq.s32.totalorder %s12, 0
    %p95 = por %p93, %p94
    %p96 = scmp.ne.s32.totalorder %s88, %s90
    %p97 = scmp.eq.s32.totalorder %s17, 1
    %p98 = por %p96, %p97
    %p99 = scmp.ne.s32.totalorder %s90, %s91
    %p100 = scmp.eq.s32.totalorder %s17, 0
    %p101 = por %p99, %p100
    %p102 = scmp.ne.s32.totalorder %s90, %s91
    %p103 = scmp.eq.s32.totalorder %s18, 1
    %p104 = por %p102, %p103
    %p106 = scmp.ne.s32.totalorder %s91, %s105
    %p107 = scmp.eq.s32.totalorder %s18, 0
    %p108 = por %p106, %p107
    %s110 = sadd.s32 %s109, 1
    %p113 = scmp.eq.s32.totalorder %s12, 1
    %p114 = scmp.ne.s32.totalorder %s109, %s111
    %p115 = scmp.eq.s32.totalorder %s12, 0
    %p116 = por %p114, %p115
    %p117 = scmp.ne.s32.totalorder %s109, %s111
    %p118 = scmp.eq.s32.totalorder %s17, 1
    %p119 = por %p117, %p118
    %p120 = scmp.ne.s32.totalorder %s111, %s112
    %p121 = scmp.eq.s32.totalorder %s17, 0
    %p122 = por %p120, %p121
    %p123 = scmp.ne.s32.totalorder %s111, %s112
    %p124 = scmp.eq.s32.totalorder %s18, 1
    %p125 = por %p123, %p124
    %p127 = scmp.ne.s32.totalorder %s112, %s126
    %p128 = scmp.eq.s32.totalorder %s18, 0
    %p129 = por %p127, %p128
    %s130 = ssub.s32 %s19, %s31
    %p131 = scmp.eq.s32.totalorder %s130, 0
    %s133 = sadd.s32 %s132, 1
    %s134 = scalar_select %p131, %s132, %s133
    %p137 = pneg %p131
    %p138 = scmp.eq.s32.totalorder %s12, 1
    %p139 = por %p137, %p138
    %p140 = scmp.ne.s32.totalorder %s132, %s135
    %p141 = scmp.eq.s32.totalorder %s12, 0
    %p142 = por %p140, %p141
    %p143 = scmp.ne.s32.totalorder %s132, %s135
    %p144 = scmp.eq.s32.totalorder %s17, 1
    %p145 = por %p143, %p144
    %p146 = scmp.ne.s32.totalorder %s135, %s136
    %p147 = scmp.eq.s32.totalorder %s17, 0
    %p148 = por %p146, %p147
    %p149 = scmp.ne.s32.totalorder %s135, %s136
    %p150 = scmp.eq.s32.totalorder %s18, 1
    %p151 = por %p149, %p150
    %p153 = scmp.ne.s32.totalorder %s136, %s152
    %p154 = scmp.eq.s32.totalorder %s18, 0
    %p155 = por %p153, %p154
    %s156 = ssub.s32 %s19, %s31
    %p157 = scmp.eq.s32.totalorder %s156, 0
    %s159 = sadd.s32 %s158, 1
    %s160 = scalar_select %p157, %s158, %s159
    %p163 = pneg %p157
    %p164 = scmp.eq.s32.totalorder %s12, 1
    %p165 = por %p163, %p164
    %p166 = scmp.ne.s32.totalorder %s158, %s161
    %p167 = scmp.eq.s32.totalorder %s12, 0
    %p168 = por %p166, %p167
    %p169 = scmp.ne.s32.totalorder %s158, %s161
    %p170 = scmp.eq.s32.totalorder %s17, 1
    %p171 = por %p169, %p170
    %p172 = scmp.ne.s32.totalorder %s161, %s162
    %p173 = scmp.eq.s32.totalorder %s17, 0
    %p174 = por %p172, %p173
    %p175 = scmp.ne.s32.totalorder %s161, %s162
    %p176 = scmp.eq.s32.totalorder %s18, 1
    %p177 = por %p175, %p176
    %p179 = scmp.ne.s32.totalorder %s162, %s178
    %p180 = scmp.eq.s32.totalorder %s18, 0
    %p181 = por %p179, %p180
    %p182 = scmp.le.s32.totalorder 1, %s12
    %p183 = scmp.lt.s32.totalorder %s12, 3
    %p184 = pnand %p182, %p183
    %p185 = pneg %p184
    // Predicated region
    $region9: #{combined_loss.1} parent=5 // pred_check
      _
    $region10: #{combined_loss.1} parent=5 // pred_check_branch
      %187 = sbr.rel (%p184) target = $region12
    $region11: #{combined_loss.1} parent=5 // pred_region
      %s188 = ssub.s32 %s12, 1
      // Predicated region
      $region13: #{combined_loss.1} parent=11 // pred_check
        %p189 = pneg %p101
      $region14: #{combined_loss.1} parent=11 // pred_check_branch
        %191 = sbr.rel (%p189) target = $region16
      $region15: #{combined_loss.1} parent=11 // pred_region
        _
      $region16: #{combined_loss.1} parent=11 // pred_fallthru
        _
      // Predicated region
      $region17: #{combined_loss.1} parent=11 // pred_check
        %p192 = pneg %p122
      $region18: #{combined_loss.1} parent=11 // pred_check_branch
        %194 = sbr.rel (%p192) target = $region20
      $region19: #{combined_loss.1} parent=11 // pred_region
        _
      $region20: #{combined_loss.1} parent=11 // pred_fallthru
        _
    $region12: #{combined_loss.1} parent=5 // pred_fallthru
      _
    %p195 = scmp.lt.s32.totalorder %s12, 2
    // Predicated region
    $region21: #{combined_loss.1} parent=5 // pred_check
      %p196 = pneg %p195
    $region22: #{combined_loss.1} parent=5 // pred_check_branch
      %198 = sbr.rel (%p196) target = $region24
    $region23: #{combined_loss.1} parent=5 // pred_region
      // Predicated region
      $region25: #{combined_loss.1} parent=23 // pred_check
        %p199 = pneg %p46
      $region26: #{combined_loss.1} parent=23 // pred_check_branch
        %201 = sbr.rel (%p199) target = $region28
      $region27: #{combined_loss.1} parent=23 // pred_region
        %s202 = sadd.s32 %s19, %s20
        %s203 = smul.u32 4, %s202
        %p204 = scmp.lt.s32.totalorder %s203, 7
        %s205 = scalar_select %p204, %s203, 7
        %s206 = smul.addr %s205, 2
        %s207 = smul.addr %s206, 8
        %s208 = scalar_lea.vmem %s0, %s207
        %s209 = sadd.s32 %s19, %s20
        %s210 = smul.u32 4, %s209
      $region28: #{combined_loss.1} parent=23 // pred_fallthru
        _
      // Predicated region
      $region29: #{combined_loss.1} parent=23 // pred_check
        %p211 = pneg %p74
      $region30: #{combined_loss.1} parent=23 // pred_check_branch
        %213 = sbr.rel (%p211) target = $region32
      $region31: #{combined_loss.1} parent=23 // pred_region
        %s214 = sadd.s32 %s19, %s20
        %s215 = smul.u32 4, %s214
        %p216 = scmp.lt.s32.totalorder %s215, 7
        %s217 = scalar_select %p216, %s215, 7
        %s218 = smul.addr %s217, 2
        %s219 = smul.addr %s218, 8
        %s220 = scalar_lea.vmem %s1, %s219
        %s221 = sadd.s32 %s19, %s20
        %s222 = smul.u32 4, %s221
      $region32: #{combined_loss.1} parent=23 // pred_fallthru
        _
    $region24: #{combined_loss.1} parent=5 // pred_fallthru
      _
    %p223 = scmp.le.s32.totalorder 1, %s12
    %p224 = scmp.lt.s32.totalorder %s12, 3
    %p225 = pnand %p223, %p224
    %p226 = pneg %p225
    // Predicated region
    $region33: #{combined_loss.1} parent=5 // pred_check
      _
    $region34: #{combined_loss.1} parent=5 // pred_check_branch
      %228 = sbr.rel (%p225) target = $region36
    $region35: #{combined_loss.1} parent=5 // pred_region
      %s229 = ssub.s32 %s12, 1
      %s230 = sadd.s32 %s21, %s22
      %s231 = smul.u32 4, %s230
      %p232 = scmp.lt.s32.totalorder %s231, 7
      %s233 = scalar_select %p232, %s231, 7
      %s234 = smul.addr %s233, 2
      %s235 = smul.addr %s234, 8
      %s236 = scalar_lea.vmem %s0, %s235
      %p237 = pneg %p52
      %p238 = pneg %p49
      %s239 = sadd.s32 %s21, %s22
      %s240 = smul.u32 4, %s239
      %p241 = scmp.lt.s32.totalorder %s240, 7
      %s242 = scalar_select %p241, %s240, 7
      %s243 = smul.addr %s242, 2
      %s244 = smul.addr %s243, 8
      %s245 = scalar_lea.vmem %s1, %s244
      %p246 = pneg %p80
      %p247 = pneg %p77
      %p248 = pneg %p101
      %p249 = pneg %p98
      %p250 = pneg %p122
      %p251 = pneg %p119
      %p252 = pneg %p148
      %p253 = pneg %p145
      %p254 = scmp.lt.s32.totalorder %s21, 1
      %s255 = scalar_select %p254, %s21, 1
      %s256 = smul.addr %s255, 8
      %s257 = scalar_lea.vmem %s4, %s256
      %p258 = pneg %p174
      %p259 = pneg %p171
      %p260 = scmp.lt.s32.totalorder %s21, 1
      %s261 = scalar_select %p260, %s21, 1
      %s262 = smul.addr %s261, 8
      %s263 = scalar_lea.vmem %s5, %s262
      %s264 = sadd.s32 %s21, %s22
      %s265 = smul.u32 4, %s264
      %p266 = scmp.lt.s32.totalorder %s265, 7
      %s267 = scalar_select %p266, %s265, 7
      %s268 = smul.addr %s267, 2
      %s269 = smul.addr %s268, 8
      %s270 = scalar_lea.vmem %s0, %s269
      %s271 = sadd.s32 %s21, %s22
      %s272 = smul.u32 4, %s271
      %s273 = sadd.s32 %s21, %s22
      %s274 = smul.u32 4, %s273
      %p275 = scmp.lt.s32.totalorder %s274, 7
      %s276 = scalar_select %p275, %s274, 7
      %s277 = smul.addr %s276, 2
      %s278 = smul.addr %s277, 8
      %s279 = scalar_lea.vmem %s1, %s278
      %s280 = sadd.s32 %s21, %s22
      %s281 = smul.u32 4, %s280
      %p282 = scmp.lt.s32.totalorder %s21, 1
      %s283 = scalar_select %p282, %s21, 1
      %s284 = smul.addr %s283, 8
      %s285 = scalar_lea.vmem %s4, %s284
      %p286 = scmp.lt.s32.totalorder %s21, 1
      %s287 = scalar_select %p286, %s21, 1
      %s288 = smul.addr %s287, 8
      %s289 = scalar_lea.vmem %s5, %s288
      %p290 = scmp.eq.s32.totalorder %s22, 0
      // Predicated region
      $region37: #{combined_loss.1} parent=35 // pred_check
        %p291 = pneg %p290
      $region38: #{combined_loss.1} parent=35 // pred_check_branch
        %293 = sbr.rel (%p291) target = $region40
      $region39: #{combined_loss.1} parent=35 // pred_region
        %294 = vst [vmem:[%s285] sm:$0xff] 0.0
        %295 = vst [vmem:[%s289] sm:$0xff] 0.0
      $region40: #{combined_loss.1} parent=35 // pred_fallthru
        _
      %v296 = vld [vmem:[%s2] sm:$0xff]
      %v297 = vld [vmem:[%s2 + $0x8] sm:$0xff]
      %v298 = vld [vmem:[%s2 + $0x10] sm:$0xff]
      %v299 = vld [vmem:[%s2 + $0x18] sm:$0xff]
      %v300 = vld [vmem:[%s2 + $0x20] sm:$0xff]
      %v301 = vld [vmem:[%s2 + $0x28] sm:$0xff]
      %v302 = vld [vmem:[%s2 + $0x30] sm:$0xff]
      %v303 = vld [vmem:[%s2 + $0x38] sm:$0xff]
      %v304 = vld [vmem:[%s2 + $0x40] sm:$0xff]
      %v305 = vld [vmem:[%s2 + $0x48] sm:$0xff]
      %v306 = vld [vmem:[%s2 + $0x50] sm:$0xff]
      %v307 = vld [vmem:[%s2 + $0x58] sm:$0xff]
      %v308 = vld [vmem:[%s2 + $0x60] sm:$0xff]
      %v309 = vld [vmem:[%s2 + $0x68] sm:$0xff]
      %v310 = vld [vmem:[%s2 + $0x70] sm:$0xff]
      %v311 = vld [vmem:[%s2 + $0x78] sm:$0xff]
      %v312 = vld [vmem:[%s3] sm:$0xff]
      %v313 = vld [vmem:[%s270] sm:$0xff]
      %v314 = vld [vmem:[%s270 + $0x8] sm:$0xff]
      %v315 = vld [vmem:[%s270 + $0x10] sm:$0xff]
      %v316 = vld [vmem:[%s270 + $0x18] sm:$0xff]
      %v317 = vld [vmem:[%s270 + $0x20] sm:$0xff]
      %v318 = vld [vmem:[%s270 + $0x28] sm:$0xff]
      %v319 = vld [vmem:[%s270 + $0x30] sm:$0xff]
      %v320 = vld [vmem:[%s270 + $0x38] sm:$0xff]
      %v321 = vld [vmem:[%s279] sm:$0xff]
      %v322 = vld [vmem:[%s279 + $0x8] sm:$0xff]
      %v323 = vld [vmem:[%s279 + $0x10] sm:$0xff]
      %v324 = vld [vmem:[%s279 + $0x18] sm:$0xff]
      %v325 = vld [vmem:[%s279 + $0x20] sm:$0xff]
      %v326 = vld [vmem:[%s279 + $0x28] sm:$0xff]
      %v327 = vld [vmem:[%s279 + $0x30] sm:$0xff]
      %v328 = vld [vmem:[%s279 + $0x38] sm:$0xff]
      %v329 = vsub.f32 %v313, %v321
      %v330 = vsub.f32 %v314, %v322
      %v331 = vsub.f32 %v315, %v323
      %v332 = vsub.f32 %v316, %v324
      %v333 = vsub.f32 %v317, %v325
      %v334 = vsub.f32 %v318, %v326
      %v335 = vsub.f32 %v319, %v327
      %v336 = vsub.f32 %v320, %v328
      %v337 = vand.u32 2147483647, %v329
      %v338 = vand.u32 2147483647, %v330
      %v339 = vand.u32 2147483647, %v331
      %v340 = vand.u32 2147483647, %v332
      %v341 = vand.u32 2147483647, %v333
      %v342 = vand.u32 2147483647, %v334
      %v343 = vand.u32 2147483647, %v335
      %v344 = vand.u32 2147483647, %v336
      %v345 = vld [vmem:[%s285] sm:$0xff]
      %v346 = vadd.f32 %v337, %v338
      %v347 = vadd.f32 %v346, %v339
      %v348 = vadd.f32 %v347, %v340
      %v349 = vadd.f32 %v348, %v341
      %v350 = vadd.f32 %v349, %v342
      %v351 = vadd.f32 %v350, %v343
      %v352 = vadd.f32 %v351, %v344
      %v353 = vadd.f32 %v345, %v352
      %354 = vst [vmem:[%s285] sm:$0xff] %v353
      %355 = vmatpush.msra.mxu0 %v311
      %356 = vmatpush.msra.mxu0 %v310
      %357 = vmatpush.msra.mxu0 %v309
      %358 = vmatpush.msra.mxu0 %v308
      %359 = vmatpush.msra.mxu0 %v307
      %360 = vmatpush.msra.mxu0 %v306
      %361 = vmatpush.msra.mxu0 %v305
      %362 = vmatpush.msra.mxu0 %v304
      %363 = vmatpush.msra.mxu0 %v303
      %364 = vmatpush.msra.mxu0 %v302
      %365 = vmatpush.msra.mxu0 %v301
      %366 = vmatpush.msra.mxu0 %v300
      %367 = vmatpush.msra.mxu0 %v299
      %368 = vmatpush.msra.mxu0 %v298
      %369 = vmatpush.msra.mxu0 %v297
      %370 = vmatpush.msra.mxu0 %v296
      %371 = vmatmul.f32.gmra.mxu0 %v313
      %v372 = vpop.f32.mrf.mxu0
      %v373 = vadd.f32 0.0, %v372
      %374 = vmatmul.f32.gmra.mxu0 %v314
      %v375 = vpop.f32.mrf.mxu0
      %v376 = vadd.f32 0.0, %v375
      %377 = vmatmul.f32.gmra.mxu0 %v315
      %v378 = vpop.f32.mrf.mxu0
      %v379 = vadd.f32 0.0, %v378
      %380 = vmatmul.f32.gmra.mxu0 %v316
      %v381 = vpop.f32.mrf.mxu0
      %v382 = vadd.f32 0.0, %v381
      %383 = vmatmul.f32.gmra.mxu0 %v317
      %v384 = vpop.f32.mrf.mxu0
      %v385 = vadd.f32 0.0, %v384
      %386 = vmatmul.f32.gmra.mxu0 %v318
      %v387 = vpop.f32.mrf.mxu0
      %v388 = vadd.f32 0.0, %v387
      %389 = vmatmul.f32.gmra.mxu0 %v319
      %v390 = vpop.f32.mrf.mxu0
      %v391 = vadd.f32 0.0, %v390
      %392 = vmatmul.f32.gmra.mxu0 %v320
      %v393 = vpop.f32.mrf.mxu0
      %v394 = vadd.f32 0.0, %v393
      %395 = vdwg.mxu0
      %396 = vst [vmem:[#allocation2] sm:$0xff] %v373
      %397 = vst [vmem:[#allocation2 + $0x8] sm:$0xff] %v376
      %398 = vst [vmem:[#allocation2 + $0x10] sm:$0xff] %v379
      %399 = vst [vmem:[#allocation2 + $0x18] sm:$0xff] %v382
      %400 = vst [vmem:[#allocation2 + $0x20] sm:$0xff] %v385
      %401 = vst [vmem:[#allocation2 + $0x28] sm:$0xff] %v388
      %402 = vst [vmem:[#allocation2 + $0x30] sm:$0xff] %v391
      %403 = vst [vmem:[#allocation2 + $0x38] sm:$0xff] %v394
      %v404 = vld [vmem:[#allocation2] sm:$0xff]
      %v405 = vld [vmem:[#allocation2 + $0x8] sm:$0xff]
      %vm406 = vcmask 130048
      %v408 = vsel %vm406, %v312, 0
      %410 = vmatpush.msra.mxu0 0.0
      %411 = vmatpush.msra.mxu0 0.0
      %412 = vmatpush.msra.mxu0 0.0
      %413 = vmatpush.msra.mxu0 0.0
      %414 = vmatpush.msra.mxu0 0.0
      %415 = vmatpush.msra.mxu0 0.0
      %416 = vmatpush.msra.mxu0 0.0
      %417 = vmatpush.msra.mxu0 0.0
      %418 = vmatpush.msra.mxu0 0.0
      %419 = vmatpush.msra.mxu0 0.0
      %420 = vmatpush.msra.mxu0 0.0
      %421 = vmatpush.msra.mxu0 0.0
      %422 = vmatpush.msra.mxu0 0.0
      %423 = vmatpush.msra.mxu0 0.0
      %424 = vmatpush.msra.mxu0 %v405
      %425 = vmatpush.msra.mxu0 %v404
      %426 = vmatmul.f32.gmra.mxu0 %v408
      %v427 = vpop.f32.mrf.mxu0
      %v428 = vadd.f32 0.0, %v427
      %429 = vdwg.mxu0
      %430 = vst [vmem:[#allocation3] sm:$0xff] %v428
      %v431 = vld [vmem:[#allocation2 + $0x10] sm:$0xff]
      %v432 = vld [vmem:[#allocation2 + $0x18] sm:$0xff]
      %433 = vmatpush.msra.mxu0 0.0
      %434 = vmatpush.msra.mxu0 0.0
      %435 = vmatpush.msra.mxu0 0.0
      %436 = vmatpush.msra.mxu0 0.0
      %437 = vmatpush.msra.mxu0 0.0
      %438 = vmatpush.msra.mxu0 0.0
      %439 = vmatpush.msra.mxu0 0.0
      %440 = vmatpush.msra.mxu0 0.0
      %441 = vmatpush.msra.mxu0 0.0
      %442 = vmatpush.msra.mxu0 0.0
      %443 = vmatpush.msra.mxu0 0.0
      %444 = vmatpush.msra.mxu0 0.0
      %445 = vmatpush.msra.mxu0 0.0
      %446 = vmatpush.msra.mxu0 0.0
      %447 = vmatpush.msra.mxu0 %v432
      %448 = vmatpush.msra.mxu0 %v431
      %449 = vmatmul.f32.gmra.mxu0 %v408
      %v450 = vpop.f32.mrf.mxu0
      %v451 = vadd.f32 0.0, %v450
      %452 = vdwg.mxu0
      %453 = vst [vmem:[#allocation3 + $0x8] sm:$0xff] %v451
      %v454 = vld [vmem:[#allocation2 + $0x20] sm:$0xff]
      %v455 = vld [vmem:[#allocation2 + $0x28] sm:$0xff]
      %456 = vmatpush.msra.mxu0 0.0
      %457 = vmatpush.msra.mxu0 0.0
      %458 = vmatpush.msra.mxu0 0.0
      %459 = vmatpush.msra.mxu0 0.0
      %460 = vmatpush.msra.mxu0 0.0
      %461 = vmatpush.msra.mxu0 0.0
      %462 = vmatpush.msra.mxu0 0.0
      %463 = vmatpush.msra.mxu0 0.0
      %464 = vmatpush.msra.mxu0 0.0
      %465 = vmatpush.msra.mxu0 0.0
      %466 = vmatpush.msra.mxu0 0.0
      %467 = vmatpush.msra.mxu0 0.0
      %468 = vmatpush.msra.mxu0 0.0
      %469 = vmatpush.msra.mxu0 0.0
      %470 = vmatpush.msra.mxu0 %v455
      %471 = vmatpush.msra.mxu0 %v454
      %472 = vmatmul.f32.gmra.mxu0 %v408
      %v473 = vpop.f32.mrf.mxu0
      %v474 = vadd.f32 0.0, %v473
      %475 = vdwg.mxu0
      %476 = vst [vmem:[#allocation3 + $0x10] sm:$0xff] %v474
      %v477 = vld [vmem:[#allocation2 + $0x30] sm:$0xff]
      %v478 = vld [vmem:[#allocation2 + $0x38] sm:$0xff]
      %479 = vmatpush.msra.mxu0 0.0
      %480 = vmatpush.msra.mxu0 0.0
      %481 = vmatpush.msra.mxu0 0.0
      %482 = vmatpush.msra.mxu0 0.0
      %483 = vmatpush.msra.mxu0 0.0
      %484 = vmatpush.msra.mxu0 0.0
      %485 = vmatpush.msra.mxu0 0.0
      %486 = vmatpush.msra.mxu0 0.0
      %487 = vmatpush.msra.mxu0 0.0
      %488 = vmatpush.msra.mxu0 0.0
      %489 = vmatpush.msra.mxu0 0.0
      %490 = vmatpush.msra.mxu0 0.0
      %491 = vmatpush.msra.mxu0 0.0
      %492 = vmatpush.msra.mxu0 0.0
      %493 = vmatpush.msra.mxu0 %v478
      %494 = vmatpush.msra.mxu0 %v477
      %495 = vmatmul.f32.gmra.mxu0 %v408
      %v496 = vpop.f32.mrf.mxu0
      %v497 = vadd.f32 0.0, %v496
      %498 = vdwg.mxu0
      %499 = vst [vmem:[#allocation3 + $0x18] sm:$0xff] %v497
      %500 = vmatpush.msra.mxu0 %v311
      %501 = vmatpush.msra.mxu0 %v310
      %502 = vmatpush.msra.mxu0 %v309
      %503 = vmatpush.msra.mxu0 %v308
      %504 = vmatpush.msra.mxu0 %v307
      %505 = vmatpush.msra.mxu0 %v306
      %506 = vmatpush.msra.mxu0 %v305
      %507 = vmatpush.msra.mxu0 %v304
      %508 = vmatpush.msra.mxu0 %v303
      %509 = vmatpush.msra.mxu0 %v302
      %510 = vmatpush.msra.mxu0 %v301
      %511 = vmatpush.msra.mxu0 %v300
      %512 = vmatpush.msra.mxu0 %v299
      %513 = vmatpush.msra.mxu0 %v298
      %514 = vmatpush.msra.mxu0 %v297
      %515 = vmatpush.msra.mxu0 %v296
      %516 = vmatmul.f32.gmra.mxu0 %v321
      %v517 = vpop.f32.mrf.mxu0
      %v518 = vadd.f32 0.0, %v517
      %519 = vmatmul.f32.gmra.mxu0 %v322
      %v520 = vpop.f32.mrf.mxu0
      %v521 = vadd.f32 0.0, %v520
      %522 = vmatmul.f32.gmra.mxu0 %v323
      %v523 = vpop.f32.mrf.mxu0
      %v524 = vadd.f32 0.0, %v523
      %525 = vmatmul.f32.gmra.mxu0 %v324
      %v526 = vpop.f32.mrf.mxu0
      %v527 = vadd.f32 0.0, %v526
      %528 = vmatmul.f32.gmra.mxu0 %v325
      %v529 = vpop.f32.mrf.mxu0
      %v530 = vadd.f32 0.0, %v529
      %531 = vmatmul.f32.gmra.mxu0 %v326
      %v532 = vpop.f32.mrf.mxu0
      %v533 = vadd.f32 0.0, %v532
      %534 = vmatmul.f32.gmra.mxu0 %v327
      %v535 = vpop.f32.mrf.mxu0
      %v536 = vadd.f32 0.0, %v535
      %537 = vmatmul.f32.gmra.mxu0 %v328
      %v538 = vpop.f32.mrf.mxu0
      %v539 = vadd.f32 0.0, %v538
      %540 = vdwg.mxu0
      %541 = vst [vmem:[#allocation2] sm:$0xff] %v518
      %542 = vst [vmem:[#allocation2 + $0x8] sm:$0xff] %v521
      %543 = vst [vmem:[#allocation2 + $0x10] sm:$0xff] %v524
      %544 = vst [vmem:[#allocation2 + $0x18] sm:$0xff] %v527
      %545 = vst [vmem:[#allocation2 + $0x20] sm:$0xff] %v530
      %546 = vst [vmem:[#allocation2 + $0x28] sm:$0xff] %v533
      %547 = vst [vmem:[#allocation2 + $0x30] sm:$0xff] %v536
      %548 = vst [vmem:[#allocation2 + $0x38] sm:$0xff] %v539
      %v549 = vld [vmem:[#allocation2] sm:$0xff]
      %v550 = vld [vmem:[#allocation2 + $0x8] sm:$0xff]
      %551 = vmatpush.msra.mxu0 0.0
      %552 = vmatpush.msra.mxu0 0.0
      %553 = vmatpush.msra.mxu0 0.0
      %554 = vmatpush.msra.mxu0 0.0
      %555 = vmatpush.msra.mxu0 0.0
      %556 = vmatpush.msra.mxu0 0.0
      %557 = vmatpush.msra.mxu0 0.0
      %558 = vmatpush.msra.mxu0 0.0
      %559 = vmatpush.msra.mxu0 0.0
      %560 = vmatpush.msra.mxu0 0.0
      %561 = vmatpush.msra.mxu0 0.0
      %562 = vmatpush.msra.mxu0 0.0
      %563 = vmatpush.msra.mxu0 0.0
      %564 = vmatpush.msra.mxu0 0.0
      %565 = vmatpush.msra.mxu0 %v550
      %566 = vmatpush.msra.mxu0 %v549
      %567 = vmatmul.f32.gmra.mxu0 %v408
      %v568 = vpop.f32.mrf.mxu0
      %v569 = vadd.f32 0.0, %v568
      %570 = vdwg.mxu0
      %571 = vst [vmem:[#allocation3 + $0x20] sm:$0xff] %v569
      %v572 = vld [vmem:[#allocation2 + $0x10] sm:$0xff]
      %v573 = vld [vmem:[#allocation2 + $0x18] sm:$0xff]
      %574 = vmatpush.msra.mxu0 0.0
      %575 = vmatpush.msra.mxu0 0.0
      %576 = vmatpush.msra.mxu0 0.0
      %577 = vmatpush.msra.mxu0 0.0
      %578 = vmatpush.msra.mxu0 0.0
      %579 = vmatpush.msra.mxu0 0.0
      %580 = vmatpush.msra.mxu0 0.0
      %581 = vmatpush.msra.mxu0 0.0
      %582 = vmatpush.msra.mxu0 0.0
      %583 = vmatpush.msra.mxu0 0.0
      %584 = vmatpush.msra.mxu0 0.0
      %585 = vmatpush.msra.mxu0 0.0
      %586 = vmatpush.msra.mxu0 0.0
      %587 = vmatpush.msra.mxu0 0.0
      %588 = vmatpush.msra.mxu0 %v573
      %589 = vmatpush.msra.mxu0 %v572
      %590 = vmatmul.f32.gmra.mxu0 %v408
      %v591 = vpop.f32.mrf.mxu0
      %v592 = vadd.f32 0.0, %v591
      %593 = vdwg.mxu0
      %594 = vst [vmem:[#allocation3 + $0x28] sm:$0xff] %v592
      %v595 = vld [vmem:[#allocation2 + $0x20] sm:$0xff]
      %v596 = vld [vmem:[#allocation2 + $0x28] sm:$0xff]
      %597 = vmatpush.msra.mxu0 0.0
      %598 = vmatpush.msra.mxu0 0.0
      %599 = vmatpush.msra.mxu0 0.0
      %600 = vmatpush.msra.mxu0 0.0
      %601 = vmatpush.msra.mxu0 0.0
      %602 = vmatpush.msra.mxu0 0.0
      %603 = vmatpush.msra.mxu0 0.0
      %604 = vmatpush.msra.mxu0 0.0
      %605 = vmatpush.msra.mxu0 0.0
      %606 = vmatpush.msra.mxu0 0.0
      %607 = vmatpush.msra.mxu0 0.0
      %608 = vmatpush.msra.mxu0 0.0
      %609 = vmatpush.msra.mxu0 0.0
      %610 = vmatpush.msra.mxu0 0.0
      %611 = vmatpush.msra.mxu0 %v596
      %612 = vmatpush.msra.mxu0 %v595
      %613 = vmatmul.f32.gmra.mxu0 %v408
      %v614 = vpop.f32.mrf.mxu0
      %v615 = vadd.f32 0.0, %v614
      %616 = vdwg.mxu0
      %617 = vst [vmem:[#allocation3 + $0x30] sm:$0xff] %v615
      %v618 = vld [vmem:[#allocation2 + $0x30] sm:$0xff]
      %v619 = vld [vmem:[#allocation2 + $0x38] sm:$0xff]
      %620 = vmatpush.msra.mxu0 0.0
      %621 = vmatpush.msra.mxu0 0.0
      %622 = vmatpush.msra.mxu0 0.0
      %623 = vmatpush.msra.mxu0 0.0
      %624 = vmatpush.msra.mxu0 0.0
      %625 = vmatpush.msra.mxu0 0.0
      %626 = vmatpush.msra.mxu0 0.0
      %627 = vmatpush.msra.mxu0 0.0
      %628 = vmatpush.msra.mxu0 0.0
      %629 = vmatpush.msra.mxu0 0.0
      %630 = vmatpush.msra.mxu0 0.0
      %631 = vmatpush.msra.mxu0 0.0
      %632 = vmatpush.msra.mxu0 0.0
      %633 = vmatpush.msra.mxu0 0.0
      %634 = vmatpush.msra.mxu0 %v619
      %635 = vmatpush.msra.mxu0 %v618
      %636 = vmatmul.f32.gmra.mxu0 %v408
      %v637 = vpop.f32.mrf.mxu0
      %v638 = vadd.f32 0.0, %v637
      %639 = vdwg.mxu0
      %640 = vst [vmem:[#allocation3 + $0x38] sm:$0xff] %v638
      %v641 = vmul.f32 %v313, %v313
      %v642 = vmul.f32 %v314, %v314
      %v643 = vmul.f32 %v315, %v315
      %v644 = vmul.f32 %v316, %v316
      %v645 = vmul.f32 %v317, %v317
      %v646 = vmul.f32 %v318, %v318
      %v647 = vmul.f32 %v319, %v319
      %v648 = vmul.f32 %v320, %v320
      %649 = vmatpush.msra.mxu0 %v311
      %650 = vmatpush.msra.mxu0 %v310
      %651 = vmatpush.msra.mxu0 %v309
      %652 = vmatpush.msra.mxu0 %v308
      %653 = vmatpush.msra.mxu0 %v307
      %654 = vmatpush.msra.mxu0 %v306
      %655 = vmatpush.msra.mxu0 %v305
      %656 = vmatpush.msra.mxu0 %v304
      %657 = vmatpush.msra.mxu0 %v303
      %658 = vmatpush.msra.mxu0 %v302
      %659 = vmatpush.msra.mxu0 %v301
      %660 = vmatpush.msra.mxu0 %v300
      %661 = vmatpush.msra.mxu0 %v299
      %662 = vmatpush.msra.mxu0 %v298
      %663 = vmatpush.msra.mxu0 %v297
      %664 = vmatpush.msra.mxu0 %v296
      %665 = vmatmul.f32.gmra.mxu0 %v641
      %v666 = vpop.f32.mrf.mxu0
      %v667 = vadd.f32 0.0, %v666
      %668 = vmatmul.f32.gmra.mxu0 %v642
      %v669 = vpop.f32.mrf.mxu0
      %v670 = vadd.f32 0.0, %v669
      %671 = vmatmul.f32.gmra.mxu0 %v643
      %v672 = vpop.f32.mrf.mxu0
      %v673 = vadd.f32 0.0, %v672
      %674 = vmatmul.f32.gmra.mxu0 %v644
      %v675 = vpop.f32.mrf.mxu0
      %v676 = vadd.f32 0.0, %v675
      %677 = vmatmul.f32.gmra.mxu0 %v645
      %v678 = vpop.f32.mrf.mxu0
      %v679 = vadd.f32 0.0, %v678
      %680 = vmatmul.f32.gmra.mxu0 %v646
      %v681 = vpop.f32.mrf.mxu0
      %v682 = vadd.f32 0.0, %v681
      %683 = vmatmul.f32.gmra.mxu0 %v647
      %v684 = vpop.f32.mrf.mxu0
      %v685 = vadd.f32 0.0, %v684
      %686 = vmatmul.f32.gmra.mxu0 %v648
      %v687 = vpop.f32.mrf.mxu0
      %v688 = vadd.f32 0.0, %v687
      %689 = vdwg.mxu0
      %690 = vst [vmem:[#allocation2] sm:$0xff] %v667
      %691 = vst [vmem:[#allocation2 + $0x8] sm:$0xff] %v670
      %692 = vst [vmem:[#allocation2 + $0x10] sm:$0xff] %v673
      %693 = vst [vmem:[#allocation2 + $0x18] sm:$0xff] %v676
      %694 = vst [vmem:[#allocation2 + $0x20] sm:$0xff] %v679
      %695 = vst [vmem:[#allocation2 + $0x28] sm:$0xff] %v682
      %696 = vst [vmem:[#allocation2 + $0x30] sm:$0xff] %v685
      %697 = vst [vmem:[#allocation2 + $0x38] sm:$0xff] %v688
      %v698 = vld [vmem:[#allocation2] sm:$0xff]
      %v699 = vld [vmem:[#allocation2 + $0x8] sm:$0xff]
      %700 = vmatpush.msra.mxu0 0.0
      %701 = vmatpush.msra.mxu0 0.0
      %702 = vmatpush.msra.mxu0 0.0
      %703 = vmatpush.msra.mxu0 0.0
      %704 = vmatpush.msra.mxu0 0.0
      %705 = vmatpush.msra.mxu0 0.0
      %706 = vmatpush.msra.mxu0 0.0
      %707 = vmatpush.msra.mxu0 0.0
      %708 = vmatpush.msra.mxu0 0.0
      %709 = vmatpush.msra.mxu0 0.0
      %710 = vmatpush.msra.mxu0 0.0
      %711 = vmatpush.msra.mxu0 0.0
      %712 = vmatpush.msra.mxu0 0.0
      %713 = vmatpush.msra.mxu0 0.0
      %714 = vmatpush.msra.mxu0 %v699
      %715 = vmatpush.msra.mxu0 %v698
      %716 = vmatmul.f32.gmra.mxu0 %v408
      %v717 = vpop.f32.mrf.mxu0
      %v718 = vadd.f32 0.0, %v717
      %719 = vdwg.mxu0
      %720 = vst [vmem:[#allocation3 + $0x40] sm:$0xff] %v718
      %v721 = vld [vmem:[#allocation2 + $0x10] sm:$0xff]
      %v722 = vld [vmem:[#allocation2 + $0x18] sm:$0xff]
      %723 = vmatpush.msra.mxu0 0.0
      %724 = vmatpush.msra.mxu0 0.0
      %725 = vmatpush.msra.mxu0 0.0
      %726 = vmatpush.msra.mxu0 0.0
      %727 = vmatpush.msra.mxu0 0.0
      %728 = vmatpush.msra.mxu0 0.0
      %729 = vmatpush.msra.mxu0 0.0
      %730 = vmatpush.msra.mxu0 0.0
      %731 = vmatpush.msra.mxu0 0.0
      %732 = vmatpush.msra.mxu0 0.0
      %733 = vmatpush.msra.mxu0 0.0
      %734 = vmatpush.msra.mxu0 0.0
      %735 = vmatpush.msra.mxu0 0.0
      %736 = vmatpush.msra.mxu0 0.0
      %737 = vmatpush.msra.mxu0 %v722
      %738 = vmatpush.msra.mxu0 %v721
      %739 = vmatmul.f32.gmra.mxu0 %v408
      %v740 = vpop.f32.mrf.mxu0
      %v741 = vadd.f32 0.0, %v740
      %742 = vdwg.mxu0
      %743 = vst [vmem:[#allocation3 + $0x48] sm:$0xff] %v741
      %v744 = vld [vmem:[#allocation2 + $0x20] sm:$0xff]
      %v745 = vld [vmem:[#allocation2 + $0x28] sm:$0xff]
      %746 = vmatpush.msra.mxu0 0.0
      %747 = vmatpush.msra.mxu0 0.0
      %748 = vmatpush.msra.mxu0 0.0
      %749 = vmatpush.msra.mxu0 0.0
      %750 = vmatpush.msra.mxu0 0.0
      %751 = vmatpush.msra.mxu0 0.0
      %752 = vmatpush.msra.mxu0 0.0
      %753 = vmatpush.msra.mxu0 0.0
      %754 = vmatpush.msra.mxu0 0.0
      %755 = vmatpush.msra.mxu0 0.0
      %756 = vmatpush.msra.mxu0 0.0
      %757 = vmatpush.msra.mxu0 0.0
      %758 = vmatpush.msra.mxu0 0.0
      %759 = vmatpush.msra.mxu0 0.0
      %760 = vmatpush.msra.mxu0 %v745
      %761 = vmatpush.msra.mxu0 %v744
      %762 = vmatmul.f32.gmra.mxu0 %v408
      %v763 = vpop.f32.mrf.mxu0
      %v764 = vadd.f32 0.0, %v763
      %765 = vdwg.mxu0
      %766 = vst [vmem:[#allocation3 + $0x50] sm:$0xff] %v764
      %v767 = vld [vmem:[#allocation2 + $0x30] sm:$0xff]
      %v768 = vld [vmem:[#allocation2 + $0x38] sm:$0xff]
      %769 = vmatpush.msra.mxu0 0.0
      %770 = vmatpush.msra.mxu0 0.0
      %771 = vmatpush.msra.mxu0 0.0
      %772 = vmatpush.msra.mxu0 0.0
      %773 = vmatpush.msra.mxu0 0.0
      %774 = vmatpush.msra.mxu0 0.0
      %775 = vmatpush.msra.mxu0 0.0
      %776 = vmatpush.msra.mxu0 0.0
      %777 = vmatpush.msra.mxu0 0.0
      %778 = vmatpush.msra.mxu0 0.0
      %779 = vmatpush.msra.mxu0 0.0
      %780 = vmatpush.msra.mxu0 0.0
      %781 = vmatpush.msra.mxu0 0.0
      %782 = vmatpush.msra.mxu0 0.0
      %783 = vmatpush.msra.mxu0 %v768
      %784 = vmatpush.msra.mxu0 %v767
      %785 = vmatmul.f32.gmra.mxu0 %v408
      %v786 = vpop.f32.mrf.mxu0
      %v787 = vadd.f32 0.0, %v786
      %788 = vdwg.mxu0
      %789 = vst [vmem:[#allocation3 + $0x58] sm:$0xff] %v787
      %v790 = vmul.f32 %v321, %v321
      %v791 = vmul.f32 %v322, %v322
      %v792 = vmul.f32 %v323, %v323
      %v793 = vmul.f32 %v324, %v324
      %v794 = vmul.f32 %v325, %v325
      %v795 = vmul.f32 %v326, %v326
      %v796 = vmul.f32 %v327, %v327
      %v797 = vmul.f32 %v328, %v328
      %798 = vmatpush.msra.mxu0 %v311
      %799 = vmatpush.msra.mxu0 %v310
      %800 = vmatpush.msra.mxu0 %v309
      %801 = vmatpush.msra.mxu0 %v308
      %802 = vmatpush.msra.mxu0 %v307
      %803 = vmatpush.msra.mxu0 %v306
      %804 = vmatpush.msra.mxu0 %v305
      %805 = vmatpush.msra.mxu0 %v304
      %806 = vmatpush.msra.mxu0 %v303
      %807 = vmatpush.msra.mxu0 %v302
      %808 = vmatpush.msra.mxu0 %v301
      %809 = vmatpush.msra.mxu0 %v300
      %810 = vmatpush.msra.mxu0 %v299
      %811 = vmatpush.msra.mxu0 %v298
      %812 = vmatpush.msra.mxu0 %v297
      %813 = vmatpush.msra.mxu0 %v296
      %814 = vmatmul.f32.gmra.mxu0 %v790
      %v815 = vpop.f32.mrf.mxu0
      %v816 = vadd.f32 0.0, %v815
      %817 = vmatmul.f32.gmra.mxu0 %v791
      %v818 = vpop.f32.mrf.mxu0
      %v819 = vadd.f32 0.0, %v818
      %820 = vmatmul.f32.gmra.mxu0 %v792
      %v821 = vpop.f32.mrf.mxu0
      %v822 = vadd.f32 0.0, %v821
      %823 = vmatmul.f32.gmra.mxu0 %v793
      %v824 = vpop.f32.mrf.mxu0
      %v825 = vadd.f32 0.0, %v824
      %826 = vmatmul.f32.gmra.mxu0 %v794
      %v827 = vpop.f32.mrf.mxu0
      %v828 = vadd.f32 0.0, %v827
      %829 = vmatmul.f32.gmra.mxu0 %v795
      %v830 = vpop.f32.mrf.mxu0
      %v831 = vadd.f32 0.0, %v830
      %832 = vmatmul.f32.gmra.mxu0 %v796
      %v833 = vpop.f32.mrf.mxu0
      %v834 = vadd.f32 0.0, %v833
      %835 = vmatmul.f32.gmra.mxu0 %v797
      %v836 = vpop.f32.mrf.mxu0
      %v837 = vadd.f32 0.0, %v836
      %838 = vdwg.mxu0
      %839 = vst [vmem:[#allocation2] sm:$0xff] %v816
      %840 = vst [vmem:[#allocation2 + $0x8] sm:$0xff] %v819
      %841 = vst [vmem:[#allocation2 + $0x10] sm:$0xff] %v822
      %842 = vst [vmem:[#allocation2 + $0x18] sm:$0xff] %v825
      %843 = vst [vmem:[#allocation2 + $0x20] sm:$0xff] %v828
      %844 = vst [vmem:[#allocation2 + $0x28] sm:$0xff] %v831
      %845 = vst [vmem:[#allocation2 + $0x30] sm:$0xff] %v834
      %846 = vst [vmem:[#allocation2 + $0x38] sm:$0xff] %v837
      %v847 = vld [vmem:[#allocation2] sm:$0xff]
      %v848 = vld [vmem:[#allocation2 + $0x8] sm:$0xff]
      %849 = vmatpush.msra.mxu0 0.0
      %850 = vmatpush.msra.mxu0 0.0
      %851 = vmatpush.msra.mxu0 0.0
      %852 = vmatpush.msra.mxu0 0.0
      %853 = vmatpush.msra.mxu0 0.0
      %854 = vmatpush.msra.mxu0 0.0
      %855 = vmatpush.msra.mxu0 0.0
      %856 = vmatpush.msra.mxu0 0.0
      %857 = vmatpush.msra.mxu0 0.0
      %858 = vmatpush.msra.mxu0 0.0
      %859 = vmatpush.msra.mxu0 0.0
      %860 = vmatpush.msra.mxu0 0.0
      %861 = vmatpush.msra.mxu0 0.0
      %862 = vmatpush.msra.mxu0 0.0
      %863 = vmatpush.msra.mxu0 %v848
      %864 = vmatpush.msra.mxu0 %v847
      %865 = vmatmul.f32.gmra.mxu0 %v408
      %v866 = vpop.f32.mrf.mxu0
      %v867 = vadd.f32 0.0, %v866
      %868 = vdwg.mxu0
      %869 = vst [vmem:[#allocation3 + $0x60] sm:$0xff] %v867
      %v870 = vld [vmem:[#allocation2 + $0x10] sm:$0xff]
      %v871 = vld [vmem:[#allocation2 + $0x18] sm:$0xff]
      %872 = vmatpush.msra.mxu0 0.0
      %873 = vmatpush.msra.mxu0 0.0
      %874 = vmatpush.msra.mxu0 0.0
      %875 = vmatpush.msra.mxu0 0.0
      %876 = vmatpush.msra.mxu0 0.0
      %877 = vmatpush.msra.mxu0 0.0
      %878 = vmatpush.msra.mxu0 0.0
      %879 = vmatpush.msra.mxu0 0.0
      %880 = vmatpush.msra.mxu0 0.0
      %881 = vmatpush.msra.mxu0 0.0
      %882 = vmatpush.msra.mxu0 0.0
      %883 = vmatpush.msra.mxu0 0.0
      %884 = vmatpush.msra.mxu0 0.0
      %885 = vmatpush.msra.mxu0 0.0
      %886 = vmatpush.msra.mxu0 %v871
      %887 = vmatpush.msra.mxu0 %v870
      %888 = vmatmul.f32.gmra.mxu0 %v408
      %v889 = vpop.f32.mrf.mxu0
      %v890 = vadd.f32 0.0, %v889
      %891 = vdwg.mxu0
      %892 = vst [vmem:[#allocation3 + $0x68] sm:$0xff] %v890
      %v893 = vld [vmem:[#allocation2 + $0x20] sm:$0xff]
      %v894 = vld [vmem:[#allocation2 + $0x28] sm:$0xff]
      %895 = vmatpush.msra.mxu0 0.0
      %896 = vmatpush.msra.mxu0 0.0
      %897 = vmatpush.msra.mxu0 0.0
      %898 = vmatpush.msra.mxu0 0.0
      %899 = vmatpush.msra.mxu0 0.0
      %900 = vmatpush.msra.mxu0 0.0
      %901 = vmatpush.msra.mxu0 0.0
      %902 = vmatpush.msra.mxu0 0.0
      %903 = vmatpush.msra.mxu0 0.0
      %904 = vmatpush.msra.mxu0 0.0
      %905 = vmatpush.msra.mxu0 0.0
      %906 = vmatpush.msra.mxu0 0.0
      %907 = vmatpush.msra.mxu0 0.0
      %908 = vmatpush.msra.mxu0 0.0
      %909 = vmatpush.msra.mxu0 %v894
      %910 = vmatpush.msra.mxu0 %v893
      %911 = vmatmul.f32.gmra.mxu0 %v408
      %v912 = vpop.f32.mrf.mxu0
      %v913 = vadd.f32 0.0, %v912
      %914 = vdwg.mxu0
      %915 = vst [vmem:[#allocation3 + $0x70] sm:$0xff] %v913
      %v916 = vld [vmem:[#allocation2 + $0x30] sm:$0xff]
      %v917 = vld [vmem:[#allocation2 + $0x38] sm:$0xff]
      %918 = vmatpush.msra.mxu0 0.0
      %919 = vmatpush.msra.mxu0 0.0
      %920 = vmatpush.msra.mxu0 0.0
      %921 = vmatpush.msra.mxu0 0.0
      %922 = vmatpush.msra.mxu0 0.0
      %923 = vmatpush.msra.mxu0 0.0
      %924 = vmatpush.msra.mxu0 0.0
      %925 = vmatpush.msra.mxu0 0.0
      %926 = vmatpush.msra.mxu0 0.0
      %927 = vmatpush.msra.mxu0 0.0
      %928 = vmatpush.msra.mxu0 0.0
      %929 = vmatpush.msra.mxu0 0.0
      %930 = vmatpush.msra.mxu0 0.0
      %931 = vmatpush.msra.mxu0 0.0
      %932 = vmatpush.msra.mxu0 %v917
      %933 = vmatpush.msra.mxu0 %v916
      %934 = vmatmul.f32.gmra.mxu0 %v408
      %v935 = vpop.f32.mrf.mxu0
      %v936 = vadd.f32 0.0, %v935
      %937 = vdwg.mxu0
      %938 = vst [vmem:[#allocation3 + $0x78] sm:$0xff] %v936
      %v939 = vmul.f32 %v313, %v321
      %v940 = vmul.f32 %v314, %v322
      %v941 = vmul.f32 %v315, %v323
      %v942 = vmul.f32 %v316, %v324
      %v943 = vmul.f32 %v317, %v325
      %v944 = vmul.f32 %v318, %v326
      %v945 = vmul.f32 %v319, %v327
      %v946 = vmul.f32 %v320, %v328
      %947 = vmatpush.msra.mxu0 %v311
      %948 = vmatpush.msra.mxu0 %v310
      %949 = vmatpush.msra.mxu0 %v309
      %950 = vmatpush.msra.mxu0 %v308
      %951 = vmatpush.msra.mxu0 %v307
      %952 = vmatpush.msra.mxu0 %v306
      %953 = vmatpush.msra.mxu0 %v305
      %954 = vmatpush.msra.mxu0 %v304
      %955 = vmatpush.msra.mxu0 %v303
      %956 = vmatpush.msra.mxu0 %v302
      %957 = vmatpush.msra.mxu0 %v301
      %958 = vmatpush.msra.mxu0 %v300
      %959 = vmatpush.msra.mxu0 %v299
      %960 = vmatpush.msra.mxu0 %v298
      %961 = vmatpush.msra.mxu0 %v297
      %962 = vmatpush.msra.mxu0 %v296
      %963 = vmatmul.f32.gmra.mxu0 %v939
      %v964 = vpop.f32.mrf.mxu0
      %v965 = vadd.f32 0.0, %v964
      %966 = vmatmul.f32.gmra.mxu0 %v940
      %v967 = vpop.f32.mrf.mxu0
      %v968 = vadd.f32 0.0, %v967
      %969 = vmatmul.f32.gmra.mxu0 %v941
      %v970 = vpop.f32.mrf.mxu0
      %v971 = vadd.f32 0.0, %v970
      %972 = vmatmul.f32.gmra.mxu0 %v942
      %v973 = vpop.f32.mrf.mxu0
      %v974 = vadd.f32 0.0, %v973
      %975 = vmatmul.f32.gmra.mxu0 %v943
      %v976 = vpop.f32.mrf.mxu0
      %v977 = vadd.f32 0.0, %v976
      %978 = vmatmul.f32.gmra.mxu0 %v944
      %v979 = vpop.f32.mrf.mxu0
      %v980 = vadd.f32 0.0, %v979
      %981 = vmatmul.f32.gmra.mxu0 %v945
      %v982 = vpop.f32.mrf.mxu0
      %v983 = vadd.f32 0.0, %v982
      %984 = vmatmul.f32.gmra.mxu0 %v946
      %v985 = vpop.f32.mrf.mxu0
      %v986 = vadd.f32 0.0, %v985
      %987 = vdwg.mxu0
      %988 = vst [vmem:[#allocation2] sm:$0xff] %v965
      %989 = vst [vmem:[#allocation2 + $0x8] sm:$0xff] %v968
      %990 = vst [vmem:[#allocation2 + $0x10] sm:$0xff] %v971
      %991 = vst [vmem:[#allocation2 + $0x18] sm:$0xff] %v974
      %992 = vst [vmem:[#allocation2 + $0x20] sm:$0xff] %v977
      %993 = vst [vmem:[#allocation2 + $0x28] sm:$0xff] %v980
      %994 = vst [vmem:[#allocation2 + $0x30] sm:$0xff] %v983
      %995 = vst [vmem:[#allocation2 + $0x38] sm:$0xff] %v986
      %v996 = vld [vmem:[#allocation2] sm:$0xff]
      %v997 = vld [vmem:[#allocation2 + $0x8] sm:$0xff]
      %998 = vmatpush.msra.mxu0 0.0
      %999 = vmatpush.msra.mxu0 0.0
      %1000 = vmatpush.msra.mxu0 0.0
      %1001 = vmatpush.msra.mxu0 0.0
      %1002 = vmatpush.msra.mxu0 0.0
      %1003 = vmatpush.msra.mxu0 0.0
      %1004 = vmatpush.msra.mxu0 0.0
      %1005 = vmatpush.msra.mxu0 0.0
      %1006 = vmatpush.msra.mxu0 0.0
      %1007 = vmatpush.msra.mxu0 0.0
      %1008 = vmatpush.msra.mxu0 0.0
      %1009 = vmatpush.msra.mxu0 0.0
      %1010 = vmatpush.msra.mxu0 0.0
      %1011 = vmatpush.msra.mxu0 0.0
      %1012 = vmatpush.msra.mxu0 %v997
      %1013 = vmatpush.msra.mxu0 %v996
      %1014 = vmatmul.f32.gmra.mxu0 %v408
      %v1015 = vpop.f32.mrf.mxu0
      %v1016 = vadd.f32 0.0, %v1015
      %1017 = vdwg.mxu0
      %1018 = vst [vmem:[#allocation3 + $0x80] sm:$0xff] %v1016
      %v1019 = vld [vmem:[#allocation2 + $0x10] sm:$0xff]
      %v1020 = vld [vmem:[#allocation2 + $0x18] sm:$0xff]
      %1021 = vmatpush.msra.mxu0 0.0
      %1022 = vmatpush.msra.mxu0 0.0
      %1023 = vmatpush.msra.mxu0 0.0
      %1024 = vmatpush.msra.mxu0 0.0
      %1025 = vmatpush.msra.mxu0 0.0
      %1026 = vmatpush.msra.mxu0 0.0
      %1027 = vmatpush.msra.mxu0 0.0
      %1028 = vmatpush.msra.mxu0 0.0
      %1029 = vmatpush.msra.mxu0 0.0
      %1030 = vmatpush.msra.mxu0 0.0
      %1031 = vmatpush.msra.mxu0 0.0
      %1032 = vmatpush.msra.mxu0 0.0
      %1033 = vmatpush.msra.mxu0 0.0
      %1034 = vmatpush.msra.mxu0 0.0
      %1035 = vmatpush.msra.mxu0 %v1020
      %1036 = vmatpush.msra.mxu0 %v1019
      %1037 = vmatmul.f32.gmra.mxu0 %v408
      %v1038 = vpop.f32.mrf.mxu0
      %v1039 = vadd.f32 0.0, %v1038
      %1040 = vdwg.mxu0
      %1041 = vst [vmem:[#allocation3 + $0x88] sm:$0xff] %v1039
      %v1042 = vld [vmem:[#allocation2 + $0x20] sm:$0xff]
      %v1043 = vld [vmem:[#allocation2 + $0x28] sm:$0xff]
      %1044 = vmatpush.msra.mxu0 0.0
      %1045 = vmatpush.msra.mxu0 0.0
      %1046 = vmatpush.msra.mxu0 0.0
      %1047 = vmatpush.msra.mxu0 0.0
      %1048 = vmatpush.msra.mxu0 0.0
      %1049 = vmatpush.msra.mxu0 0.0
      %1050 = vmatpush.msra.mxu0 0.0
      %1051 = vmatpush.msra.mxu0 0.0
      %1052 = vmatpush.msra.mxu0 0.0
      %1053 = vmatpush.msra.mxu0 0.0
      %1054 = vmatpush.msra.mxu0 0.0
      %1055 = vmatpush.msra.mxu0 0.0
      %1056 = vmatpush.msra.mxu0 0.0
      %1057 = vmatpush.msra.mxu0 0.0
      %1058 = vmatpush.msra.mxu0 %v1043
      %1059 = vmatpush.msra.mxu0 %v1042
      %1060 = vmatmul.f32.gmra.mxu0 %v408
      %v1061 = vpop.f32.mrf.mxu0
      %v1062 = vadd.f32 0.0, %v1061
      %1063 = vdwg.mxu0
      %1064 = vst [vmem:[#allocation3 + $0x90] sm:$0xff] %v1062
      %v1065 = vld [vmem:[#allocation2 + $0x30] sm:$0xff]
      %v1066 = vld [vmem:[#allocation2 + $0x38] sm:$0xff]
      %1067 = vmatpush.msra.mxu0 0.0
      %1068 = vmatpush.msra.mxu0 0.0
      %1069 = vmatpush.msra.mxu0 0.0
      %1070 = vmatpush.msra.mxu0 0.0
      %1071 = vmatpush.msra.mxu0 0.0
      %1072 = vmatpush.msra.mxu0 0.0
      %1073 = vmatpush.msra.mxu0 0.0
      %1074 = vmatpush.msra.mxu0 0.0
      %1075 = vmatpush.msra.mxu0 0.0
      %1076 = vmatpush.msra.mxu0 0.0
      %1077 = vmatpush.msra.mxu0 0.0
      %1078 = vmatpush.msra.mxu0 0.0
      %1079 = vmatpush.msra.mxu0 0.0
      %1080 = vmatpush.msra.mxu0 0.0
      %1081 = vmatpush.msra.mxu0 %v1066
      %1082 = vmatpush.msra.mxu0 %v1065
      %1083 = vmatmul.f32.gmra.mxu0 %v408
      %v1084 = vpop.f32.mrf.mxu0
      %v1085 = vadd.f32 0.0, %v1084
      %1086 = vdwg.mxu0
      %1087 = vst [vmem:[#allocation3 + $0x98] sm:$0xff] %v1085
      %v1088 = vld [vmem:[#allocation3] sm:$0xff]
      %v1089 = vld [vmem:[#allocation3 + $0x8] sm:$0xff]
      %v1090 = vld [vmem:[#allocation3 + $0x10] sm:$0xff]
      %v1091 = vld [vmem:[#allocation3 + $0x18] sm:$0xff]
      %v1092 = vld [vmem:[#allocation3 + $0x20] sm:$0xff]
      %v1093 = vld [vmem:[#allocation3 + $0x28] sm:$0xff]
      %v1094 = vld [vmem:[#allocation3 + $0x30] sm:$0xff]
      %v1095 = vld [vmem:[#allocation3 + $0x38] sm:$0xff]
      %v1096 = vld [vmem:[#allocation3 + $0x40] sm:$0xff]
      %v1097 = vld [vmem:[#allocation3 + $0x48] sm:$0xff]
      %v1098 = vld [vmem:[#allocation3 + $0x50] sm:$0xff]
      %v1099 = vld [vmem:[#allocation3 + $0x58] sm:$0xff]
      %v1100 = vld [vmem:[#allocation3 + $0x60] sm:$0xff]
      %v1101 = vld [vmem:[#allocation3 + $0x68] sm:$0xff]
      %v1102 = vld [vmem:[#allocation3 + $0x70] sm:$0xff]
      %v1103 = vld [vmem:[#allocation3 + $0x78] sm:$0xff]
      %v1104 = vld [vmem:[#allocation3 + $0x80] sm:$0xff]
      %v1105 = vld [vmem:[#allocation3 + $0x88] sm:$0xff]
      %v1106 = vld [vmem:[#allocation3 + $0x90] sm:$0xff]
      %v1107 = vld [vmem:[#allocation3 + $0x98] sm:$0xff]
      %v1108 = vmul.f32 %v1088, %v1088
      %v1109 = vmul.f32 %v1089, %v1089
      %v1110 = vmul.f32 %v1090, %v1090
      %v1111 = vmul.f32 %v1091, %v1091
      %v1112 = vmul.f32 %v1092, %v1092
      %v1113 = vmul.f32 %v1093, %v1093
      %v1114 = vmul.f32 %v1094, %v1094
      %v1115 = vmul.f32 %v1095, %v1095
      %v1116 = vmul.f32 %v1088, %v1092
      %v1117 = vmul.f32 %v1089, %v1093
      %v1118 = vmul.f32 %v1090, %v1094
      %v1119 = vmul.f32 %v1091, %v1095
      %v1120 = vsub.f32 %v1096, %v1108
      %v1121 = vsub.f32 %v1097, %v1109
      %v1122 = vsub.f32 %v1098, %v1110
      %v1123 = vsub.f32 %v1099, %v1111
      %v1124 = vsub.f32 %v1100, %v1112
      %v1125 = vsub.f32 %v1101, %v1113
      %v1126 = vsub.f32 %v1102, %v1114
      %v1127 = vsub.f32 %v1103, %v1115
      %v1128 = vsub.f32 %v1104, %v1116
      %v1129 = vsub.f32 %v1105, %v1117
      %v1130 = vsub.f32 %v1106, %v1118
      %v1131 = vsub.f32 %v1107, %v1119
      %v1132 = vmul.f32 %v1116, 2.0
      %v1133 = vmul.f32 %v1117, 2.0
      %v1134 = vmul.f32 %v1118, 2.0
      %v1135 = vmul.f32 %v1119, 2.0
      %v1136 = vadd.f32 %v1132, 0.0001
      %v1137 = vadd.f32 %v1133, 0.0001
      %v1138 = vadd.f32 %v1134, 0.0001
      %v1139 = vadd.f32 %v1135, 0.0001
      %v1140 = vmul.f32 %v1128, 2.0
      %v1141 = vmul.f32 %v1129, 2.0
      %v1142 = vmul.f32 %v1130, 2.0
      %v1143 = vmul.f32 %v1131, 2.0
      %v1144 = vadd.f32 %v1140, 0.0009
      %v1145 = vadd.f32 %v1141, 0.0009
      %v1146 = vadd.f32 %v1142, 0.0009
      %v1147 = vadd.f32 %v1143, 0.0009
      %v1148 = vmul.f32 %v1136, %v1144
      %v1149 = vmul.f32 %v1137, %v1145
      %v1150 = vmul.f32 %v1138, %v1146
      %v1151 = vmul.f32 %v1139, %v1147
      %v1152 = vadd.f32 %v1108, %v1112
      %v1153 = vadd.f32 %v1109, %v1113
      %v1154 = vadd.f32 %v1110, %v1114
      %v1155 = vadd.f32 %v1111, %v1115
      %v1156 = vadd.f32 %v1152, 0.0001
      %v1157 = vadd.f32 %v1153, 0.0001
      %v1158 = vadd.f32 %v1154, 0.0001
      %v1159 = vadd.f32 %v1155, 0.0001
      %v1160 = vadd.f32 %v1120, %v1124
      %v1161 = vadd.f32 %v1121, %v1125
      %v1162 = vadd.f32 %v1122, %v1126
      %v1163 = vadd.f32 %v1123, %v1127
      %v1164 = vadd.f32 %v1160, 0.0009
      %v1165 = vadd.f32 %v1161, 0.0009
      %v1166 = vadd.f32 %v1162, 0.0009
      %v1167 = vadd.f32 %v1163, 0.0009
      %v1168 = vmul.f32 %v1156, %v1164
      %v1169 = vmul.f32 %v1157, %v1165
      %v1170 = vmul.f32 %v1158, %v1166
      %v1171 = vmul.f32 %v1159, %v1167
      %v1172 = vrcp.pop %v1168
      %v1173 = vrcp.pop %v1169
      %v1174 = vrcp.pop %v1170
      %v1175 = vrcp.pop %v1171
      %v1176 = vmul.f32 %v1148, %v1172
      %v1177 = vmul.f32 %v1149, %v1173
      %v1178 = vmul.f32 %v1150, %v1174
      %v1179 = vmul.f32 %v1151, %v1175
      %v1180 = vlaneseq
      %v1181 = vshrl.u32 %v1180, 7
      %vm1182 = vcmp.lt.s32.totalorder %v1181, 6
      %v1183 = vlaneseq
      %v1184 = vand.u32 %v1183, 127
      %vm1185 = vcmp.lt.s32.totalorder %v1184, 6
      %vm1186 = vmand %vm1182, %vm1185
      %v1187 = vsel %vm1186, 1.0, 0.0
      %s1188 = sadd.s32 %s21, %s22
      %s1189 = smul.u32 %s1188, 4
      %v1190 = vstv %s1189
      %v1191 = vadd.s32 %v1190, 1
      %v1192 = vadd.s32 %v1190, 2
      %v1193 = vadd.s32 %v1190, 3
      %vm1194 = vcmp.lt.s32.totalorder %v1190, 8
      %vm1195 = vcmp.lt.s32.totalorder %v1191, 8
      %vm1196 = vcmp.lt.s32.totalorder %v1192, 8
      %vm1197 = vcmp.lt.s32.totalorder %v1193, 8
      %v1198 = vsel %vm1194, 1.0, 0.0
      %v1199 = vsel %vm1195, 1.0, 0.0
      %v1200 = vsel %vm1196, 1.0, 0.0
      %v1201 = vsel %vm1197, 1.0, 0.0
      %v1202 = vmul.f32 %v1176, %v1187
      %v1203 = vmul.f32 %v1177, %v1187
      %v1204 = vmul.f32 %v1178, %v1187
      %v1205 = vmul.f32 %v1179, %v1187
      %v1206 = vmul.f32 %v1202, %v1198
      %v1207 = vmul.f32 %v1203, %v1199
      %v1208 = vmul.f32 %v1204, %v1200
      %v1209 = vmul.f32 %v1205, %v1201
      %v1210 = vld [vmem:[%s289] sm:$0xff]
      %v1211 = vadd.f32 %v1206, %v1207
      %v1212 = vadd.f32 %v1211, %v1208
      %v1213 = vadd.f32 %v1212, %v1209
      %v1214 = vadd.f32 %v1210, %v1213
      %1215 = vst [vmem:[%s289] sm:$0xff] %v1214
      %p1216 = scmp.lt.s32.totalorder %s21, 1
      %s1217 = scalar_select %p1216, %s21, 1
      %s1218 = smul.addr %s1217, 8
      %s1219 = scalar_lea.vmem %s4, %s1218
      %p1220 = scmp.lt.s32.totalorder %s21, 1
      %s1221 = scalar_select %p1220, %s21, 1
      %s1222 = smul.addr %s1221, 8
      %s1223 = scalar_lea.vmem %s5, %s1222
      // Predicated region
      $region41: #{combined_loss.1} parent=35 // pred_check
        %p1224 = pneg %p145
      $region42: #{combined_loss.1} parent=35 // pred_check_branch
        %1226 = sbr.rel (%p1224) target = $region44
      $region43: #{combined_loss.1} parent=35 // pred_region
        _
      $region44: #{combined_loss.1} parent=35 // pred_fallthru
        _
      // Predicated region
      $region45: #{combined_loss.1} parent=35 // pred_check
        %p1227 = pneg %p171
      $region46: #{combined_loss.1} parent=35 // pred_check_branch
        %1229 = sbr.rel (%p1227) target = $region48
      $region47: #{combined_loss.1} parent=35 // pred_region
        _
      $region48: #{combined_loss.1} parent=35 // pred_fallthru
        _
    $region36: #{combined_loss.1} parent=5 // pred_fallthru
      _
    %p1230 = scmp.le.s32.totalorder 2, %s12
    // Predicated region
    $region49: #{combined_loss.1} parent=5 // pred_check
      %p1231 = pneg %p1230
    $region50: #{combined_loss.1} parent=5 // pred_check_branch
      %1233 = sbr.rel (%p1231) target = $region52
    $region51: #{combined_loss.1} parent=5 // pred_region
      %s1234 = ssub.s32 %s12, 2
      // Predicated region
      $region53: #{combined_loss.1} parent=51 // pred_check
        %p1235 = pneg %p151
      $region54: #{combined_loss.1} parent=51 // pred_check_branch
        %1237 = sbr.rel (%p1235) target = $region56
      $region55: #{combined_loss.1} parent=51 // pred_region
        %p1238 = scmp.lt.s32.totalorder %s23, 1
        %s1239 = scalar_select %p1238, %s23, 1
        %s1240 = smul.addr %s1239, 8
        %s1241 = scalar_lea.vmem %s4, %s1240
      $region56: #{combined_loss.1} parent=51 // pred_fallthru
        _
      // Predicated region
      $region57: #{combined_loss.1} parent=51 // pred_check
        %p1242 = pneg %p177
      $region58: #{combined_loss.1} parent=51 // pred_check_branch
        %1244 = sbr.rel (%p1242) target = $region60
      $region59: #{combined_loss.1} parent=51 // pred_region
        %p1245 = scmp.lt.s32.totalorder %s23, 1
        %s1246 = scalar_select %p1245, %s23, 1
        %s1247 = smul.addr %s1246, 8
        %s1248 = scalar_lea.vmem %s5, %s1247
      $region60: #{combined_loss.1} parent=51 // pred_fallthru
        _
    $region52: #{combined_loss.1} parent=5 // pred_fallthru
      _
  $region6: #{combined_loss.1} parent=0 // loop_footer
    %s16 = sadd.s32 1, %s12
  $region7: #{combined_loss.1} parent=0 // loop_footer_branch
    %11 = sbr.rel target = $region3
  $region8: #{combined_loss.1} parent=0 // loop_exit
    _

</llo_original>
